<compile_context>
chip_gen: v6e
topology: v6e:2x2x1
jax: 0.10.0
libtpu: 0.0.40
codegen_flags: <defaults>
</compile_context>

<pallas_src>
import math

import jax
import jax.numpy as jnp
from jax.experimental import pallas as pl
from jax.experimental.pallas import tpu as pltpu


def _round_up(x, m):
    return ((x + m - 1) // m) * m


def gat_kernel(h_ref, ht_ref, w_ref, a_dst_ref, a_src_ref, mask_ref, out_ref):
    """One destination-row tile of single-head GAT.

    h_ref     : [N, IN_PAD]       node features (K zero-padded), resident
    ht_ref    : [IN_PAD, N]       h transposed (pre-transposed in the wrapper), resident
    w_ref     : [IN_PAD, OUT_PAD] fc weight, zero-padded, resident
    a_dst_ref : [1, IN_PAD]       folded attention vector (W @ a_dst)^T
    a_src_ref : [1, IN_PAD]       folded attention vector (W @ a_src)^T
    mask_ref  : [TILE, N]  int8   adjacency tile, mask[j, i] != 0 iff edge i -> j
    out_ref   : [TILE, OUT_PAD]
    """
    tile = out_ref.shape[0]
    row0 = pl.multiple_of(pl.program_id(0) * tile, tile)
    h_dst = h_ref[pl.ds(row0, tile), :]                         # [TILE, IN_PAD]

    # Attention logits.  attn_fc is linear, so a^T [z_i ; z_j] = z_i.a_src + z_j.a_dst,
    # and z.a_* = h.(W a_*): W is folded into the attention vectors outside the kernel.
    # dst contribution: VPU multiply + lane reduce -> column [TILE, 1].
    e_dst = jnp.sum(h_dst * a_dst_ref[...], axis=-1, keepdims=True)
    # src contribution: computed directly in row layout via h^T (no XLU transpose):
    # [1, IN_PAD] @ [IN_PAD, N] -> [1, N].
    e_src = jnp.dot(a_src_ref[...], ht_ref[...],
                    preferred_element_type=jnp.float32)

    scores = e_dst + e_src                                      # [TILE, N]
    scores = jnp.where(scores > 0, scores, 0.01 * scores)       # leaky_relu(0.01)

    # Masked softmax over incoming edges (src axis = lanes).
    edge = mask_ref[...].astype(jnp.float32) > 0.0
    masked = jnp.where(edge, scores, jnp.float32(-1e30))
    m = jnp.max(masked, axis=-1, keepdims=True)
    p = jnp.exp(masked - m)              # exact 0 on non-edges (underflow); max term = 1
    denom = jnp.sum(p, axis=-1, keepdims=True)                  # >= 1, never 0
    alpha = p * pl.reciprocal(denom, approx=True)               # EUP vrcp slot

    # Aggregate in feature space then project: alpha @ (h W) == (alpha @ h) @ W.
    agg = jnp.dot(alpha, h_ref[...], preferred_element_type=jnp.float32)    # [TILE, IN_PAD]
    out_ref[...] = jnp.dot(agg, w_ref[...], preferred_element_type=jnp.float32)


def gat_forward(h, w, a_src, a_dst, mask, *, tile_dst=128):
    """h: [N, in_dim], w: [in_dim, out_dim], a_*: [out_dim, 1], mask: [N, N] (dst, src)."""
    N, in_dim = h.shape
    out_dim = w.shape[1]
    assert mask.shape == (N, N)
    assert N % tile_dst == 0, "demo assumes N is a multiple of the dst tile"

    in_pad = _round_up(in_dim, 128)    # K axis -> MXU-native
    out_pad = _round_up(out_dim, 128)  # lane-dense output store

    h_pad = jnp.zeros((N, in_pad), jnp.float32).at[:, :in_dim].set(h)
    ht_pad = h_pad.T                   # transpose once, outside the kernel
    w_pad = jnp.zeros((in_pad, out_pad), jnp.float32).at[:in_dim, :out_dim].set(w)
    # Fold fc weight into attention vectors: z . a = h . (W a).  Parameter-only, done once.
    wa_dst = jnp.zeros((1, in_pad), jnp.float32).at[0, :in_dim].set((w @ a_dst)[:, 0])
    wa_src = jnp.zeros((1, in_pad), jnp.float32).at[0, :in_dim].set((w @ a_src)[:, 0])
    mask_i8 = mask.astype(jnp.int8)    # compact O(N^2) operand

    num_tiles = N // tile_dst
    resident = lambda shape: pl.BlockSpec(shape, lambda i: (0, 0))

    cost = pl.CostEstimate(
        flops=int(2 * N * N * in_pad            # alpha @ h
                  + 2 * N * in_pad * out_pad    # agg @ W
                  + 2 * in_pad * N * num_tiles  # e_src per tile
                  + 2 * N * in_pad              # e_dst
                  + 8 * N * N),                 # elementwise softmax path
        transcendentals=int(N * N),
        bytes_accessed=int(N * N                # int8 mask
                           + 2 * N * in_pad * 4
                           + in_pad * out_pad * 4
                           + N * out_pad * 4),
    )

    out = pl.pallas_call(
        gat_kernel,
        out_shape=jax.ShapeDtypeStruct((N, out_pad), jnp.float32),
        grid=(num_tiles,),
        in_specs=[
            resident((N, in_pad)),                          # h
            resident((in_pad, N)),                          # h^T
            resident((in_pad, out_pad)),                    # W (padded)
            resident((1, in_pad)),                          # W @ a_dst (row)
            resident((1, in_pad)),                          # W @ a_src (row)
            pl.BlockSpec((tile_dst, N), lambda i: (i, 0)),  # mask (streamed)
        ],
        out_specs=pl.BlockSpec((tile_dst, out_pad), lambda i: (i, 0)),
        compiler_params=pltpu.CompilerParams(
            dimension_semantics=("parallel",),
            vmem_limit_bytes=32 * 1024 * 1024,
        ),
        cost_estimate=cost,
    )(h_pad, ht_pad, w_pad, wa_dst, wa_src, mask_i8)

    return out[:, :out_dim]


def gat_reference(h, w, a_src, a_dst, mask):
    """Pure-JAX reference with the original (PyTorch) operation order."""
    z = h @ w
    scores = (z @ a_dst) + (z @ a_src).T          # [N_dst, N_src]
    scores = jnp.where(scores > 0, scores, 0.01 * scores)
    masked = jnp.where(mask > 0, scores, -1e30)
    m = jnp.max(masked, axis=-1, keepdims=True)
    p = jnp.exp(masked - m) * mask
    alpha = p / jnp.sum(p, axis=-1, keepdims=True)
    return alpha @ z


if __name__ == "__main__":
    N = 256          # number of graph nodes (2 dst tiles of 128)
    in_dim = 16
    out_dim = 32

    key = jax.random.PRNGKey(0)
    k_h, k_fc, k_attn = jax.random.split(key, 3)

    # Node features [N, in_dim]
    h = jax.random.normal(k_h, (N, in_dim), dtype=jnp.float32)

    # Deterministic init matching nn.init.xavier_normal_(gain=sqrt(2)).
    gain = math.sqrt(2.0)
    std_fc = gain * math.sqrt(2.0 / (in_dim + out_dim))
    w = jax.random.normal(k_fc, (in_dim, out_dim), dtype=jnp.float32) * std_fc
    std_a = gain * math.sqrt(2.0 / (2 * out_dim + 1))
    a_full = jax.random.normal(k_attn, (2 * out_dim,), dtype=jnp.float32) * std_a
    a_src = a_full[:out_dim].reshape(out_dim, 1)
    a_dst = a_full[out_dim:].reshape(out_dim, 1)

    # Deterministic graph: self-loops + ring edges i -> i+1 and i -> i+3 (mod N).
    # mask[j, i] = 1 iff edge src=i -> dst=j.
    idx = jnp.arange(N)
    mask = jnp.zeros((N, N), dtype=jnp.float32)
    mask = mask.at[idx, idx].set(1.0)
    mask = mask.at[(idx + 1) % N, idx].set(1.0)
    mask = mask.at[(idx + 3) % N, idx].set(1.0)

    out = gat_forward(h, w, a_src, a_dst, mask)
    out = jax.block_until_ready(out)

    ref = gat_reference(h, w, a_src, a_dst, mask)
    assert out.shape == (N, out_dim)
    # Tolerance covers the EUP approximate reciprocal (~2^-12 relative) and the
    # (alpha @ h) @ W re-association.
    assert jnp.allclose(out, ref, atol=2e-3, rtol=2e-3), "mismatch vs reference"

    print("KERNEL_OK")
</pallas_src>

<mosaic_0001>
module attributes {stable_mosaic.version = 11 : i64} {
  func.func @gat_kernel(%arg0: i32, %arg1: memref<256x128xf32, #tpu.memory_space<vmem>>, %arg2: memref<128x256xf32, #tpu.memory_space<vmem>>, %arg3: memref<128x128xf32, #tpu.memory_space<vmem>>, %arg4: memref<1x128xf32, #tpu.memory_space<vmem>>, %arg5: memref<1x128xf32, #tpu.memory_space<vmem>>, %arg6: memref<128x256xi8, #tpu.memory_space<vmem>>, %arg7: memref<128x128xf32, #tpu.memory_space<vmem>>) attributes {dimension_semantics = [#tpu.dimension_semantics<parallel>], iteration_bounds = array<i64: 2>, scalar_prefetch = 0 : i64, scratch_operands = 0 : i64, tpu.core_type = #tpu.core_type<tc>, window_params = [{pipeline_mode = #tpu.pipeline_mode<synchronous>, transform_indices = @transform_0, window_bounds = array<i64: 256, 128>}, {pipeline_mode = #tpu.pipeline_mode<synchronous>, transform_indices = @transform_1, window_bounds = array<i64: 128, 256>}, {pipeline_mode = #tpu.pipeline_mode<synchronous>, transform_indices = @transform_2, window_bounds = array<i64: 128, 128>}, {pipeline_mode = #tpu.pipeline_mode<synchronous>, transform_indices = @transform_3, window_bounds = array<i64: 1, 128>}, {pipeline_mode = #tpu.pipeline_mode<synchronous>, transform_indices = @transform_4, window_bounds = array<i64: 1, 128>}, {transform_indices = @transform_5, window_bounds = array<i64: 128, 256>}, {transform_indices = @transform_6, window_bounds = array<i64: 128, 128>}]} {
    %c128_i32 = arith.constant 128 : i32
    %0 = arith.muli %arg0, %c128_i32 : i32
    %1 = tpu.assume_multiple %0, 128 : i32
    %2 = arith.index_cast %1 : i32 to index
    %c0 = arith.constant 0 : index
    %3 = vector.load %arg1[%2, %c0] : memref<256x128xf32, #tpu.memory_space<vmem>>, vector<128x128xf32>
    %c0_0 = arith.constant 0 : index
    %c0_1 = arith.constant 0 : index
    %4 = vector.load %arg4[%c0_0, %c0_1] : memref<1x128xf32, #tpu.memory_space<vmem>>, vector<1x128xf32>
    %5 = vector.broadcast %4 : vector<1x128xf32> to vector<128x128xf32>
    %6 = arith.mulf %3, %5 : vector<128x128xf32>
    %cst = arith.constant dense<0.000000e+00> : vector<128xf32>
    %7 = vector.multi_reduction <add>, %6, %cst [1] : vector<128x128xf32> to vector<128xf32>
    %8 = vector.shape_cast %7 : vector<128xf32> to vector<128x1xf32>
    %c0_2 = arith.constant 0 : index
    %c0_3 = arith.constant 0 : index
    %9 = vector.load %arg5[%c0_2, %c0_3] : memref<1x128xf32, #tpu.memory_space<vmem>>, vector<1x128xf32>
    %c0_4 = arith.constant 0 : index
    %c0_5 = arith.constant 0 : index
    %10 = vector.load %arg2[%c0_4, %c0_5] : memref<128x256xf32, #tpu.memory_space<vmem>>, vector<128x256xf32>
    %cst_6 = arith.constant dense<0.000000e+00> : vector<1x256xf32>
    %11 = tpu.matmul %9, %10, %cst_6 {dimension_numbers = #tpu.dot_dimension_numbers<[1], [0], [0], [1], [0, 0, 1, 1], [], []>} : vector<1x128xf32>, vector<128x256xf32>, vector<1x256xf32> -> vector<1x256xf32>
    %12 = vector.broadcast %8 : vector<128x1xf32> to vector<128x256xf32>
    %13 = vector.broadcast %11 : vector<1x256xf32> to vector<128x256xf32>
    %14 = arith.addf %12, %13 : vector<128x256xf32>
    %cst_7 = arith.constant 0.000000e+00 : f32
    %15 = vector.broadcast %cst_7 : f32 to vector<128x256xf32>
    %16 = arith.cmpf ogt, %14, %15 : vector<128x256xf32>
    %cst_8 = arith.constant 0.00999999977 : f32
    %17 = vector.broadcast %cst_8 : f32 to vector<128x256xf32>
    %18 = arith.mulf %17, %14 : vector<128x256xf32>
    %19 = arith.select %16, %14, %18 : vector<128x256xi1>, vector<128x256xf32>
    %c0_9 = arith.constant 0 : index
    %c0_10 = arith.constant 0 : index
    %20 = vector.load %arg6[%c0_9, %c0_10] : memref<128x256xi8, #tpu.memory_space<vmem>>, vector<128x256xi8>
    %21 = arith.sitofp %20 : vector<128x256xi8> to vector<128x256xf32>
    %cst_11 = arith.constant 0.000000e+00 : f32
    %22 = vector.broadcast %cst_11 : f32 to vector<128x256xf32>
    %23 = arith.cmpf ogt, %21, %22 : vector<128x256xf32>
    %cst_12 = arith.constant -1.000000e+30 : f32
    %24 = vector.broadcast %cst_12 : f32 to vector<128x256xf32>
    %25 = arith.select %23, %19, %24 : vector<128x256xi1>, vector<128x256xf32>
    %cst_13 = arith.constant dense<0xFF800000> : vector<128xf32>
    %26 = vector.multi_reduction <maximumf>, %25, %cst_13 [1] : vector<128x256xf32> to vector<128xf32>
    %27 = vector.shape_cast %26 : vector<128xf32> to vector<128x1xf32>
    %28 = vector.broadcast %27 : vector<128x1xf32> to vector<128x256xf32>
    %29 = arith.subf %25, %28 : vector<128x256xf32>
    %30 = math.exp %29 : vector<128x256xf32>
    %cst_14 = arith.constant dense<0.000000e+00> : vector<128xf32>
    %31 = vector.multi_reduction <add>, %30, %cst_14 [1] : vector<128x256xf32> to vector<128xf32>
    %32 = vector.shape_cast %31 : vector<128xf32> to vector<128x1xf32>
    %33 = tpu.reciprocal %32 {approx = true} : vector<128x1xf32> -> vector<128x1xf32>
    %34 = vector.broadcast %33 : vector<128x1xf32> to vector<128x256xf32>
    %35 = arith.mulf %30, %34 : vector<128x256xf32>
    %c0_15 = arith.constant 0 : index
    %c0_16 = arith.constant 0 : index
    %36 = vector.load %arg1[%c0_15, %c0_16] : memref<256x128xf32, #tpu.memory_space<vmem>>, vector<256x128xf32>
    %cst_17 = arith.constant dense<0.000000e+00> : vector<128x128xf32>
    %37 = tpu.matmul %35, %36, %cst_17 {dimension_numbers = #tpu.dot_dimension_numbers<[1], [0], [0], [1], [0, 0, 1, 1], [], []>} : vector<128x256xf32>, vector<256x128xf32>, vector<128x128xf32> -> vector<128x128xf32>
    %c0_18 = arith.constant 0 : index
    %c0_19 = arith.constant 0 : index
    %38 = vector.load %arg3[%c0_18, %c0_19] : memref<128x128xf32, #tpu.memory_space<vmem>>, vector<128x128xf32>
    %cst_20 = arith.constant dense<0.000000e+00> : vector<128x128xf32>
    %39 = tpu.matmul %37, %38, %cst_20 {dimension_numbers = #tpu.dot_dimension_numbers<[1], [0], [0], [1], [0, 0, 1, 1], [], []>} : vector<128x128xf32>, vector<128x128xf32>, vector<128x128xf32> -> vector<128x128xf32>
    %c0_21 = arith.constant 0 : index
    %c0_22 = arith.constant 0 : index
    %40 = vector.load %arg7[%c0_21, %c0_22] : memref<128x128xf32, #tpu.memory_space<vmem>>, vector<128x128xf32>
    tpu.vector_store %arg7[%c0_21, %c0_22], %39 {strides = array<i32>} : memref<128x128xf32, #tpu.memory_space<vmem>>, vector<128x128xf32>,
    return
  }
  func.func @transform_0(%arg0: i32) -> (i32, i32) {
    %c0_i32 = arith.constant 0 : i32
    %c0_i32_0 = arith.constant 0 : i32
    %c0_i32_1 = arith.constant 0 : i32
    return %c0_i32, %c0_i32_0 : i32, i32
  }
  func.func @transform_1(%arg0: i32) -> (i32, i32) {
    %c0_i32 = arith.constant 0 : i32
    %c0_i32_0 = arith.constant 0 : i32
    %c0_i32_1 = arith.constant 0 : i32
    return %c0_i32, %c0_i32_0 : i32, i32
  }
  func.func @transform_2(%arg0: i32) -> (i32, i32) {
    %c0_i32 = arith.constant 0 : i32
    %c0_i32_0 = arith.constant 0 : i32
    %c0_i32_1 = arith.constant 0 : i32
    return %c0_i32, %c0_i32_0 : i32, i32
  }
  func.func @transform_3(%arg0: i32) -> (i32, i32) {
    %c0_i32 = arith.constant 0 : i32
    %c0_i32_0 = arith.constant 0 : i32
    %c0_i32_1 = arith.constant 0 : i32
    return %c0_i32, %c0_i32_0 : i32, i32
  }
  func.func @transform_4(%arg0: i32) -> (i32, i32) {
    %c0_i32 = arith.constant 0 : i32
    %c0_i32_0 = arith.constant 0 : i32
    %c0_i32_1 = arith.constant 0 : i32
    return %c0_i32, %c0_i32_0 : i32, i32
  }
  func.func @transform_5(%arg0: i32) -> (i32, i32) {
    %c0_i32 = arith.constant 0 : i32
    %c0_i32_0 = arith.constant 0 : i32
    return %arg0, %c0_i32 : i32, i32
  }
  func.func @transform_6(%arg0: i32) -> (i32, i32) {
    %c0_i32 = arith.constant 0 : i32
    %c0_i32_0 = arith.constant 0 : i32
    return %arg0, %c0_i32 : i32, i32
  }
}

</mosaic_0001>

<llo_original>
// kernel: tpu_custom_call.1
$region0: #{tpu_custom_call.1}
  #allocation0 [shape = 'u32[]', space=smem, size = 0x4, offset = 0x4, fixed_abs, tag = 'smem constant byte address 0x4 - core index']
  #allocation1 [shape = 'u32[144,128]{1,0:T(1,128)}', space=vmem, size = 0x12000, scoped, tag = 'internal scratch']
  %s0 = inlined_call_operand.hbm [shape: f32[256,128], index: 0, kind: input, shape index: {}]
  %s1 = inlined_call_operand.hbm [shape: f32[128,256], index: 1, kind: input, shape index: {}]
  %s2 = inlined_call_operand.hbm [shape: f32[128,128], index: 2, kind: input, shape index: {}]
  %s3 = inlined_call_operand.vmem [shape: f32[1,128], index: 3, kind: input, shape index: {}]
  %s4 = inlined_call_operand.vmem [shape: f32[1,128], index: 4, kind: input, shape index: {}]
  %s5 = inlined_call_operand.hbm [shape: s8[256,256], index: 5, kind: input, shape index: {}]
  %s6 = inlined_call_operand.hbm [shape: f32[256,128], index: 6, kind: output, shape index: {}]
  %s7 = sld [smem:[#allocation0]]
  $region73: #{tpu_custom_call.1} parent=0
    _
  %s9 = ssub.s32 1, %s7
  %s10 = scalar_select 0, %s9, %s7
  $region1: #{tpu_custom_call.1} parent=0
    #allocation2 [shape = 'u8[131072]{0}', space=vmem, size = 0x20000, scoped, tag = 'input window, operand 0, single buffered']
    #allocation3 [shape = 's32[2]{0}', space=sflag, size = 0x8, scoped, tag = 'scoped memory for tpu_custom_call.1']
    #allocation4 [shape = 's32[2]{0}', space=sflag, size = 0x8, scoped, tag = 'scoped memory for tpu_custom_call.1']
    #allocation5 [shape = 'u8[131072]{0}', space=vmem, size = 0x20000, scoped, tag = 'input window, operand 1, single buffered']
    #allocation6 [shape = 's32[1]{0}', space=sflag, size = 0x4, scoped, tag = 'scoped memory for tpu_custom_call.1']
    #allocation7 [shape = 'u8[65536]{0}', space=vmem, size = 0x10000, scoped, tag = 'input window, operand 2, single buffered']
    #allocation8 [shape = 'u8[65536]{0}', space=vmem, size = 0x10000, scoped, tag = 'input window, operand 5']
    #allocation9 [shape = 's32[2]{0}', space=sflag, size = 0x8, scoped, tag = 'scoped memory for tpu_custom_call.1']
    #allocation10 [shape = 'u8[131072]{0}', space=vmem, size = 0x20000, scoped, tag = 'output window, operand 0']
    %11 = vsyncpa [#allocation3], 0
    %12 = vsyncpa [#allocation6], 0
    %13 = vsyncpa [#allocation9], 0
    %s14 = scalar_lea.sflag [#allocation9], 1
    %15 = vsyncpa %s14, 0
    %16 = vsyncpa [#allocation4], 0
    %s17 = scalar_lea.sflag [#allocation4], 1
    %18 = vsyncpa %s17, 0
    loop: start=0, step=1, limit=4
    $region2: #{tpu_custom_call.1} parent=1 // loop_pre_header
      _
    $region3: #{tpu_custom_call.1} parent=1 // loop_header
      %s20 = sphi 0, %s24
      %p21 = scmp.ge.s32.totalorder %s20, 4
      %s28 = sphi 0, %s28
      %s30 = sphi 0, %s28
      %s31 = sphi 0, %s30
      %s45 = sphi 0, %s31
      %s49 = sphi 0, %s49
      %s51 = sphi 0, %s49
      %s52 = sphi 0, %s51
      %s66 = sphi 0, %s52
      %s70 = sphi 0, %s70
      %s72 = sphi 0, %s70
      %s73 = sphi 0, %s72
      %s87 = sphi 0, %s73
      %s91 = sphi 0, %s91
      %s93 = sphi 0, %s91
      %s94 = sphi 0, %s93
      %s108 = sphi 0, %s94
      %s112 = sphi 0, %s112
      %s114 = sphi 0, %s112
      %s115 = sphi 0, %s114
      %s129 = sphi 0, %s115
      %s135 = sphi 0, %s137
      %s138 = sphi 0, %s135
      %s139 = sphi 0, %s138
      %s155 = sphi 0, %s139
      %s161 = sphi 0, %s163
      %s164 = sphi 0, %s161
      %s165 = sphi 0, %s164
      %s181 = sphi 0, %s165
    $region4: #{tpu_custom_call.1} parent=1 // loop_header_branch
      %23 = sbr.rel (%p21) target = $region8
    $region5: #{tpu_custom_call.1} parent=1 // loop_body
      %s25 = ssub.s32 %s20, 1
      %s26 = ssub.s32 %s20, 2
      %s27 = sadd.s32 %s20, 1
      %s29 = sadd.s32 %s28, 1
      %p32 = scmp.eq.s32.totalorder %s20, 1
      %p33 = scmp.ne.s32.totalorder %s28, %s30
      %p34 = scmp.eq.s32.totalorder %s20, 0
      %p35 = por %p33, %p34
      %p36 = scmp.ne.s32.totalorder %s28, %s30
      %p37 = scmp.eq.s32.totalorder %s25, 1
      %p38 = por %p36, %p37
      %p39 = scmp.ne.s32.totalorder %s30, %s31
      %p40 = scmp.eq.s32.totalorder %s25, 0
      %p41 = por %p39, %p40
      %p42 = scmp.ne.s32.totalorder %s30, %s31
      %p43 = scmp.eq.s32.totalorder %s26, 1
      %p44 = por %p42, %p43
      %p46 = scmp.ne.s32.totalorder %s31, %s45
      %p47 = scmp.eq.s32.totalorder %s26, 0
      %p48 = por %p46, %p47
      %s50 = sadd.s32 %s49, 1
      %p53 = scmp.eq.s32.totalorder %s20, 1
      %p54 = scmp.ne.s32.totalorder %s49, %s51
      %p55 = scmp.eq.s32.totalorder %s20, 0
      %p56 = por %p54, %p55
      %p57 = scmp.ne.s32.totalorder %s49, %s51
      %p58 = scmp.eq.s32.totalorder %s25, 1
      %p59 = por %p57, %p58
      %p60 = scmp.ne.s32.totalorder %s51, %s52
      %p61 = scmp.eq.s32.totalorder %s25, 0
      %p62 = por %p60, %p61
      %p63 = scmp.ne.s32.totalorder %s51, %s52
      %p64 = scmp.eq.s32.totalorder %s26, 1
      %p65 = por %p63, %p64
      %p67 = scmp.ne.s32.totalorder %s52, %s66
      %p68 = scmp.eq.s32.totalorder %s26, 0
      %p69 = por %p67, %p68
      %s71 = sadd.s32 %s70, 1
      %p74 = scmp.eq.s32.totalorder %s20, 1
      %p75 = scmp.ne.s32.totalorder %s70, %s72
      %p76 = scmp.eq.s32.totalorder %s20, 0
      %p77 = por %p75, %p76
      %p78 = scmp.ne.s32.totalorder %s70, %s72
      %p79 = scmp.eq.s32.totalorder %s25, 1
      %p80 = por %p78, %p79
      %p81 = scmp.ne.s32.totalorder %s72, %s73
      %p82 = scmp.eq.s32.totalorder %s25, 0
      %p83 = por %p81, %p82
      %p84 = scmp.ne.s32.totalorder %s72, %s73
      %p85 = scmp.eq.s32.totalorder %s26, 1
      %p86 = por %p84, %p85
      %p88 = scmp.ne.s32.totalorder %s73, %s87
      %p89 = scmp.eq.s32.totalorder %s26, 0
      %p90 = por %p88, %p89
      %s92 = sadd.s32 %s91, 1
      %p95 = scmp.eq.s32.totalorder %s20, 1
      %p96 = scmp.ne.s32.totalorder %s91, %s93
      %p97 = scmp.eq.s32.totalorder %s20, 0
      %p98 = por %p96, %p97
      %p99 = scmp.ne.s32.totalorder %s91, %s93
      %p100 = scmp.eq.s32.totalorder %s25, 1
      %p101 = por %p99, %p100
      %p102 = scmp.ne.s32.totalorder %s93, %s94
      %p103 = scmp.eq.s32.totalorder %s25, 0
      %p104 = por %p102, %p103
      %p105 = scmp.ne.s32.totalorder %s93, %s94
      %p106 = scmp.eq.s32.totalorder %s26, 1
      %p107 = por %p105, %p106
      %p109 = scmp.ne.s32.totalorder %s94, %s108
      %p110 = scmp.eq.s32.totalorder %s26, 0
      %p111 = por %p109, %p110
      %s113 = sadd.s32 %s112, 1
      %p116 = scmp.eq.s32.totalorder %s20, 1
      %p117 = scmp.ne.s32.totalorder %s112, %s114
      %p118 = scmp.eq.s32.totalorder %s20, 0
      %p119 = por %p117, %p118
      %p120 = scmp.ne.s32.totalorder %s112, %s114
      %p121 = scmp.eq.s32.totalorder %s25, 1
      %p122 = por %p120, %p121
      %p123 = scmp.ne.s32.totalorder %s114, %s115
      %p124 = scmp.eq.s32.totalorder %s25, 0
      %p125 = por %p123, %p124
      %p126 = scmp.ne.s32.totalorder %s114, %s115
      %p127 = scmp.eq.s32.totalorder %s26, 1
      %p128 = por %p126, %p127
      %p130 = scmp.ne.s32.totalorder %s115, %s129
      %p131 = scmp.eq.s32.totalorder %s26, 0
      %p132 = por %p130, %p131
      %s133 = ssub.s32 %s20, %s27
      %p134 = scmp.eq.s32.totalorder %s133, 0
      %s136 = sadd.s32 %s135, 1
      %s137 = scalar_select %p134, %s135, %s136
      %p140 = pneg %p134
      %p141 = scmp.eq.s32.totalorder %s20, 1
      %p142 = por %p140, %p141
      %p143 = scmp.ne.s32.totalorder %s135, %s138
      %p144 = scmp.eq.s32.totalorder %s20, 0
      %p145 = por %p143, %p144
      %p146 = scmp.ne.s32.totalorder %s135, %s138
      %p147 = scmp.eq.s32.totalorder %s25, 1
      %p148 = por %p146, %p147
      %p149 = scmp.ne.s32.totalorder %s138, %s139
      %p150 = scmp.eq.s32.totalorder %s25, 0
      %p151 = por %p149, %p150
      %p152 = scmp.ne.s32.totalorder %s138, %s139
      %p153 = scmp.eq.s32.totalorder %s26, 1
      %p154 = por %p152, %p153
      %p156 = scmp.ne.s32.totalorder %s139, %s155
      %p157 = scmp.eq.s32.totalorder %s26, 0
      %p158 = por %p156, %p157
      %s159 = ssub.s32 %s20, %s27
      %p160 = scmp.eq.s32.totalorder %s159, 0
      %s162 = sadd.s32 %s161, 1
      %s163 = scalar_select %p160, %s161, %s162
      %p166 = pneg %p160
      %p167 = scmp.eq.s32.totalorder %s20, 1
      %p168 = por %p166, %p167
      %p169 = scmp.ne.s32.totalorder %s161, %s164
      %p170 = scmp.eq.s32.totalorder %s20, 0
      %p171 = por %p169, %p170
      %p172 = scmp.ne.s32.totalorder %s161, %s164
      %p173 = scmp.eq.s32.totalorder %s25, 1
      %p174 = por %p172, %p173
      %p175 = scmp.ne.s32.totalorder %s164, %s165
      %p176 = scmp.eq.s32.totalorder %s25, 0
      %p177 = por %p175, %p176
      %p178 = scmp.ne.s32.totalorder %s164, %s165
      %p179 = scmp.eq.s32.totalorder %s26, 1
      %p180 = por %p178, %p179
      %p182 = scmp.ne.s32.totalorder %s165, %s181
      %p183 = scmp.eq.s32.totalorder %s26, 0
      %p184 = por %p182, %p183
      %p185 = scmp.le.s32.totalorder 1, %s20
      %p186 = scmp.lt.s32.totalorder %s20, 3
      %p187 = pnand %p185, %p186
      %p188 = pneg %p187
      // Predicated region
      $region9: #{tpu_custom_call.1} parent=5 // pred_check
        _
      $region10: #{tpu_custom_call.1} parent=5 // pred_check_branch
        %190 = sbr.rel (%p187) target = $region12
      $region11: #{tpu_custom_call.1} parent=5 // pred_region
        %s191 = ssub.s32 %s20, 1
        // Predicated region
        $region13: #{tpu_custom_call.1} parent=11 // pred_check
          %p192 = pneg %p41
        $region14: #{tpu_custom_call.1} parent=11 // pred_check_branch
          %194 = sbr.rel (%p192) target = $region16
        $region15: #{tpu_custom_call.1} parent=11 // pred_region
          %s196 = ssub.s32 4096, 4096
          %197 = vsyncadd [#allocation3], %s196
          %s198 = sshll.u32 [#allocation2], 4
          %s199 = int_to_ptr.vmem [resolvable:$true] %s198
          %204 = dma.hbm_to_vmem [thread:$0]  %s0, 4096, %s199, [#allocation3], 128, 128, 8
        $region16: #{tpu_custom_call.1} parent=11 // pred_fallthru
          _
        // Predicated region
        $region17: #{tpu_custom_call.1} parent=11 // pred_check
          %p205 = pneg %p62
        $region18: #{tpu_custom_call.1} parent=11 // pred_check_branch
          %207 = sbr.rel (%p205) target = $region20
        $region19: #{tpu_custom_call.1} parent=11 // pred_region
          %s209 = ssub.s32 4096, 4096
          %210 = vsyncadd [#allocation6], %s209
          %s211 = sshll.u32 [#allocation5], 4
          %s212 = int_to_ptr.vmem [resolvable:$true] %s211
          %217 = dma.hbm_to_vmem [thread:$0]  %s1, 4096, %s212, [#allocation6], 256, 256, 16
        $region20: #{tpu_custom_call.1} parent=11 // pred_fallthru
          _
        // Predicated region
        $region21: #{tpu_custom_call.1} parent=11 // pred_check
          %p218 = pneg %p83
        $region22: #{tpu_custom_call.1} parent=11 // pred_check_branch
          %220 = sbr.rel (%p218) target = $region24
        $region23: #{tpu_custom_call.1} parent=11 // pred_region
          %s222 = ssub.s32 2048, 2048
          %223 = vsyncadd [#allocation6], %s222
          %s224 = sshll.u32 [#allocation7], 4
          %s225 = int_to_ptr.vmem [resolvable:$true] %s224
          %230 = dma.hbm_to_vmem [thread:$0]  %s2, 2048, %s225, [#allocation6], 128, 128, 8
        $region24: #{tpu_custom_call.1} parent=11 // pred_fallthru
          _
        // Predicated region
        $region25: #{tpu_custom_call.1} parent=11 // pred_check
          %p231 = pneg %p104
        $region26: #{tpu_custom_call.1} parent=11 // pred_check_branch
          %233 = sbr.rel (%p231) target = $region28
        $region27: #{tpu_custom_call.1} parent=11 // pred_region
          _
        $region28: #{tpu_custom_call.1} parent=11 // pred_fallthru
          _
        // Predicated region
        $region29: #{tpu_custom_call.1} parent=11 // pred_check
          %p234 = pneg %p125
        $region30: #{tpu_custom_call.1} parent=11 // pred_check_branch
          %236 = sbr.rel (%p234) target = $region32
        $region31: #{tpu_custom_call.1} parent=11 // pred_region
          _
        $region32: #{tpu_custom_call.1} parent=11 // pred_fallthru
          _
      $region12: #{tpu_custom_call.1} parent=5 // pred_fallthru
        _
      %p237 = scmp.lt.s32.totalorder %s20, 2
      // Predicated region
      $region33: #{tpu_custom_call.1} parent=5 // pred_check
        %p238 = pneg %p237
      $region34: #{tpu_custom_call.1} parent=5 // pred_check_branch
        %240 = sbr.rel (%p238) target = $region36
      $region35: #{tpu_custom_call.1} parent=5 // pred_region
        // Predicated region
        $region37: #{tpu_custom_call.1} parent=35 // pred_check
          %p241 = pneg %p145
        $region38: #{tpu_custom_call.1} parent=35 // pred_check_branch
          %243 = sbr.rel (%p241) target = $region40
        $region39: #{tpu_custom_call.1} parent=35 // pred_region
          %s244 = sand.u32 %s135, 1
          %s245 = scalar_lea.sflag [#allocation9], %s244
          %s246 = sand.u32 %s135, 1
          %s247 = smul.addr %s246, 64
          %s248 = scalar_lea.vmem [#allocation8], %s247
          %s249 = smul.u32 4, %s20
          %s251 = ssub.s32 1024, 1024
          %252 = vsyncadd %s245, %s251
          %s253 = smul.addr %s249, 2
          %s254 = smul.addr %s253, 128
          %s255 = scalar_lea.hbm %s5, %s254
          %s256 = sshll.u32 %s248, 4
          %s257 = int_to_ptr.vmem [resolvable:$true] %s256
          %262 = dma.hbm_to_vmem [thread:$0]  %s255, 1024, %s257, %s245, 256, 256, 16
        $region40: #{tpu_custom_call.1} parent=35 // pred_fallthru
          _
      $region36: #{tpu_custom_call.1} parent=5 // pred_fallthru
        _
      %p263 = scmp.le.s32.totalorder 1, %s20
      %p264 = scmp.lt.s32.totalorder %s20, 3
      %p265 = pnand %p263, %p264
      %p266 = pneg %p265
      // Predicated region
      $region41: #{tpu_custom_call.1} parent=5 // pred_check
        _
      $region42: #{tpu_custom_call.1} parent=5 // pred_check_branch
        %268 = sbr.rel (%p265) target = $region44
      $region43: #{tpu_custom_call.1} parent=5 // pred_region
        %s269 = ssub.s32 %s20, 1
        // Predicated region
        $region45: #{tpu_custom_call.1} parent=43 // pred_check
          %p270 = pneg %p41
        $region46: #{tpu_custom_call.1} parent=43 // pred_check_branch
          %272 = sbr.rel (%p270) target = $region48
        $region47: #{tpu_custom_call.1} parent=43 // pred_region
          %273 = dma.done [#allocation3], 4096
        $region48: #{tpu_custom_call.1} parent=43 // pred_fallthru
          _
        // Predicated region
        $region49: #{tpu_custom_call.1} parent=43 // pred_check
          %p274 = pneg %p62
        $region50: #{tpu_custom_call.1} parent=43 // pred_check_branch
          %276 = sbr.rel (%p274) target = $region52
        $region51: #{tpu_custom_call.1} parent=43 // pred_region
          %277 = dma.done [#allocation6], 4096
        $region52: #{tpu_custom_call.1} parent=43 // pred_fallthru
          _
        // Predicated region
        $region53: #{tpu_custom_call.1} parent=43 // pred_check
          %p278 = pneg %p83
        $region54: #{tpu_custom_call.1} parent=43 // pred_check_branch
          %280 = sbr.rel (%p278) target = $region56
        $region55: #{tpu_custom_call.1} parent=43 // pred_region
          %281 = dma.done [#allocation6], 2048
        $region56: #{tpu_custom_call.1} parent=43 // pred_fallthru
          _
        %s282 = sand.u32 %s138, 1
        %s283 = scalar_lea.sflag [#allocation9], %s282
        %s284 = sand.u32 %s138, 1
        %s285 = smul.addr %s284, 64
        %s286 = scalar_lea.vmem [#allocation8], %s285
        // Predicated region
        $region57: #{tpu_custom_call.1} parent=43 // pred_check
          %p287 = pneg %p151
        $region58: #{tpu_custom_call.1} parent=43 // pred_check_branch
          %289 = sbr.rel (%p287) target = $region60
        $region59: #{tpu_custom_call.1} parent=43 // pred_region
          %290 = dma.done %s283, 1024
        $region60: #{tpu_custom_call.1} parent=43 // pred_fallthru
          _
        %p291 = pneg %p41
        %p292 = pneg %p38
        %p293 = pneg %p62
        %p294 = pneg %p59
        %p295 = pneg %p83
        %p296 = pneg %p80
        %p297 = pneg %p104
        %p298 = pneg %p101
        %p299 = pneg %p125
        %p300 = pneg %p122
        %s301 = sand.u32 %s138, 1
        %s302 = scalar_lea.sflag [#allocation9], %s301
        %s303 = sand.u32 %s138, 1
        %s304 = smul.addr %s303, 64
        %s305 = scalar_lea.vmem [#allocation8], %s304
        %p306 = pneg %p151
        %p307 = pneg %p148
        %p308 = pneg %p177
        %p309 = pneg %p174
        %s310 = sand.u32 %s164, 1
        %s311 = scalar_lea.sflag [#allocation4], %s310
        %s312 = sand.u32 %s164, 1
        %s313 = smul.addr %s312, 128
        %s314 = scalar_lea.vmem [#allocation10], %s313
        %s315 = smul.u32 4, %s25
        %s316 = smul.u32 16, %s25
        %s317 = smul.u32 %s25, 128
        %s318 = scalar_lea.vmem [#allocation2], %s317
        %v319 = vld [vmem:[%s318] sm:$0xff]
        %v320 = vld [vmem:[%s318 + $0x8] sm:$0xff]
        %v321 = vld [vmem:[%s318 + $0x10] sm:$0xff]
        %v322 = vld [vmem:[%s318 + $0x18] sm:$0xff]
        %v323 = vld [vmem:[%s318 + $0x20] sm:$0xff]
        %v324 = vld [vmem:[%s318 + $0x28] sm:$0xff]
        %v325 = vld [vmem:[%s318 + $0x30] sm:$0xff]
        %v326 = vld [vmem:[%s318 + $0x38] sm:$0xff]
        %v327 = vld [vmem:[%s318 + $0x40] sm:$0xff]
        %v328 = vld [vmem:[%s318 + $0x48] sm:$0xff]
        %v329 = vld [vmem:[%s318 + $0x50] sm:$0xff]
        %v330 = vld [vmem:[%s318 + $0x58] sm:$0xff]
        %v331 = vld [vmem:[%s318 + $0x60] sm:$0xff]
        %v332 = vld [vmem:[%s318 + $0x68] sm:$0xff]
        %v333 = vld [vmem:[%s318 + $0x70] sm:$0xff]
        %v334 = vld [vmem:[%s318 + $0x78] sm:$0xff]
        %v335 = vld [vmem:[%s3] sm:$0x1]
        %v337 = vlaneseq
        %v338 = vshrl.u32 %v337, 7
        %v339 = vsub.s32 0, %v338
        %v340 = vrot.slane %v335, %v339
        %v342 = vmul.f32 %v319, %v340
        %v343 = vmul.f32 %v320, %v340
        %v344 = vmul.f32 %v321, %v340
        %v345 = vmul.f32 %v322, %v340
        %v346 = vmul.f32 %v323, %v340
        %v347 = vmul.f32 %v324, %v340
        %v348 = vmul.f32 %v325, %v340
        %v349 = vmul.f32 %v326, %v340
        %v350 = vmul.f32 %v327, %v340
        %v351 = vmul.f32 %v328, %v340
        %v352 = vmul.f32 %v329, %v340
        %v353 = vmul.f32 %v330, %v340
        %v354 = vmul.f32 %v331, %v340
        %v355 = vmul.f32 %v332, %v340
        %v356 = vmul.f32 %v333, %v340
        %v357 = vmul.f32 %v334, %v340
        %358 = vadd.xlane.f32.xlu0 %v342
        %v359 = vpop.xlane.xlu0 %358
        %360 = vadd.xlane.f32.xlu0 %v343
        %v361 = vpop.xlane.xlu0 %360
        %362 = vadd.xlane.f32.xlu0 %v344
        %v363 = vpop.xlane.xlu0 %362
        %364 = vadd.xlane.f32.xlu0 %v345
        %v365 = vpop.xlane.xlu0 %364
        %366 = vadd.xlane.f32.xlu0 %v346
        %v367 = vpop.xlane.xlu0 %366
        %368 = vadd.xlane.f32.xlu0 %v347
        %v369 = vpop.xlane.xlu0 %368
        %370 = vadd.xlane.f32.xlu0 %v348
        %v371 = vpop.xlane.xlu0 %370
        %372 = vadd.xlane.f32.xlu0 %v349
        %v373 = vpop.xlane.xlu0 %372
        %374 = vadd.xlane.f32.xlu0 %v350
        %v375 = vpop.xlane.xlu0 %374
        %376 = vadd.xlane.f32.xlu0 %v351
        %v377 = vpop.xlane.xlu0 %376
        %378 = vadd.xlane.f32.xlu0 %v352
        %v379 = vpop.xlane.xlu0 %378
        %380 = vadd.xlane.f32.xlu0 %v353
        %v381 = vpop.xlane.xlu0 %380
        %382 = vadd.xlane.f32.xlu0 %v354
        %v383 = vpop.xlane.xlu0 %382
        %384 = vadd.xlane.f32.xlu0 %v355
        %v385 = vpop.xlane.xlu0 %384
        %386 = vadd.xlane.f32.xlu0 %v356
        %v387 = vpop.xlane.xlu0 %386
        %388 = vadd.xlane.f32.xlu0 %v357
        %v389 = vpop.xlane.xlu0 %388
        %v390 = vld [vmem:[%s4] sm:$0x1]
        %v391 = vld [vmem:[#allocation5] sm:$0xff]
        %v392 = vld [vmem:[#allocation5 + $0x8] sm:$0xff]
        %v393 = vld [vmem:[#allocation5 + $0x10] sm:$0xff]
        %v394 = vld [vmem:[#allocation5 + $0x18] sm:$0xff]
        %v395 = vld [vmem:[#allocation5 + $0x20] sm:$0xff]
        %v396 = vld [vmem:[#allocation5 + $0x28] sm:$0xff]
        %v397 = vld [vmem:[#allocation5 + $0x30] sm:$0xff]
        %v398 = vld [vmem:[#allocation5 + $0x38] sm:$0xff]
        %v399 = vld [vmem:[#allocation5 + $0x40] sm:$0xff]
        %v400 = vld [vmem:[#allocation5 + $0x48] sm:$0xff]
        %v401 = vld [vmem:[#allocation5 + $0x50] sm:$0xff]
        %v402 = vld [vmem:[#allocation5 + $0x58] sm:$0xff]
        %v403 = vld [vmem:[#allocation5 + $0x60] sm:$0xff]
        %v404 = vld [vmem:[#allocation5 + $0x68] sm:$0xff]
        %v405 = vld [vmem:[#allocation5 + $0x70] sm:$0xff]
        %v406 = vld [vmem:[#allocation5 + $0x78] sm:$0xff]
        %v407 = vld [vmem:[#allocation5 + $0x80] sm:$0xff]
        %v408 = vld [vmem:[#allocation5 + $0x88] sm:$0xff]
        %v409 = vld [vmem:[#allocation5 + $0x90] sm:$0xff]
        %v410 = vld [vmem:[#allocation5 + $0x98] sm:$0xff]
        %v411 = vld [vmem:[#allocation5 + $0xa0] sm:$0xff]
        %v412 = vld [vmem:[#allocation5 + $0xa8] sm:$0xff]
        %v413 = vld [vmem:[#allocation5 + $0xb0] sm:$0xff]
        %v414 = vld [vmem:[#allocation5 + $0xb8] sm:$0xff]
        %v415 = vld [vmem:[#allocation5 + $0xc0] sm:$0xff]
        %v416 = vld [vmem:[#allocation5 + $0xc8] sm:$0xff]
        %v417 = vld [vmem:[#allocation5 + $0xd0] sm:$0xff]
        %v418 = vld [vmem:[#allocation5 + $0xd8] sm:$0xff]
        %v419 = vld [vmem:[#allocation5 + $0xe0] sm:$0xff]
        %v420 = vld [vmem:[#allocation5 + $0xe8] sm:$0xff]
        %v421 = vld [vmem:[#allocation5 + $0xf0] sm:$0xff]
        %v422 = vld [vmem:[#allocation5 + $0xf8] sm:$0xff]
        %423 = vmatprep.subr.mxu0 %v422
        %424 = vmatpush1.msra.mxu0 %v421
        %425 = vmatprep.subr.mxu0 %v420
        %426 = vmatpush1.msra.mxu0 %v419
        %427 = vmatprep.subr.mxu0 %v418
        %428 = vmatpush1.msra.mxu0 %v417
        %429 = vmatprep.subr.mxu0 %v416
        %430 = vmatpush1.msra.mxu0 %v415
        %431 = vmatprep.subr.mxu0 %v414
        %432 = vmatpush1.msra.mxu0 %v413
        %433 = vmatprep.subr.mxu0 %v412
        %434 = vmatpush1.msra.mxu0 %v411
        %435 = vmatprep.subr.mxu0 %v410
        %436 = vmatpush1.msra.mxu0 %v409
        %437 = vmatprep.subr.mxu0 %v408
        %438 = vmatpush1.msra.mxu0 %v407
        %439 = vmatprep.subr.mxu0 %v406
        %440 = vmatpush1.msra.mxu0 %v405
        %441 = vmatprep.subr.mxu0 %v404
        %442 = vmatpush1.msra.mxu0 %v403
        %443 = vmatprep.subr.mxu0 %v402
        %444 = vmatpush1.msra.mxu0 %v401
        %445 = vmatprep.subr.mxu0 %v400
        %446 = vmatpush1.msra.mxu0 %v399
        %447 = vmatprep.subr.mxu0 %v398
        %448 = vmatpush1.msra.mxu0 %v397
        %449 = vmatprep.subr.mxu0 %v396
        %450 = vmatpush1.msra.mxu0 %v395
        %451 = vmatprep.subr.mxu0 %v394
        %452 = vmatpush1.msra.mxu0 %v393
        %453 = vmatprep.subr.mxu0 %v392
        %454 = vmatpush1.msra.mxu0 %v391
        %455 = vmatprep.subr.mxu0 0.0
        %456 = vmatpush2.msra.mxu0 0.0
        %457 = vmatprep.subr.mxu0 0.0
        %458 = vmatpush2.msra.mxu0 0.0
        %459 = vmatprep.subr.mxu0 0.0
        %460 = vmatpush2.msra.mxu0 0.0
        %461 = vmatprep.subr.mxu0 0.0
        %462 = vmatpush2.msra.mxu0 0.0
        %463 = vmatprep.subr.mxu0 0.0
        %464 = vmatpush2.msra.mxu0 0.0
        %465 = vmatprep.subr.mxu0 0.0
        %466 = vmatpush2.msra.mxu0 0.0
        %467 = vmatprep.subr.mxu0 0.0
        %468 = vmatpush2.msra.mxu0 0.0
        %469 = vmatprep.subr.mxu0 0.0
        %470 = vmatpush2.msra.mxu0 0.0
        %471 = vmatprep.subr.mxu0 0.0
        %472 = vmatpush2.msra.mxu0 0.0
        %473 = vmatprep.subr.mxu0 0.0
        %474 = vmatpush2.msra.mxu0 0.0
        %475 = vmatprep.subr.mxu0 0.0
        %476 = vmatpush2.msra.mxu0 0.0
        %477 = vmatprep.subr.mxu0 0.0
        %478 = vmatpush2.msra.mxu0 0.0
        %479 = vmatprep.subr.mxu0 0.0
        %480 = vmatpush2.msra.mxu0 0.0
        %481 = vmatprep.subr.mxu0 0.0
        %482 = vmatpush2.msra.mxu0 0.0
        %483 = vmatprep.subr.mxu0 0.0
        %484 = vmatpush2.msra.mxu0 0.0
        %485 = vmatprep.subr.mxu0 0.0
        %486 = vmatpush2.msra.mxu0 0.0
        %487 = vmatprep.mubr.f32.mxu0 0.0
        %488 = vmatmul.mubr.f32.gmra.mxu0 %v390
        %v489 = vpop.f32.mrf.mxu0
        %v490 = vadd.f32 0.0, %v489
        %v491 = vpop.f32.mrf.mxu0
        %v492 = vadd.f32 0.0, %v491
        %493 = vdwg.mxu0
        %v494 = vlaneseq
        %v495 = vshrl.u32 %v494, 7
        %v496 = vsub.s32 0, %v495
        %v497 = vrot.slane %v490, %v496
        %v498 = vlaneseq
        %v499 = vshrl.u32 %v498, 7
        %v500 = vsub.s32 0, %v499
        %v501 = vrot.slane %v492, %v500
        %v502 = vadd.f32 %v359, %v497
        %v503 = vadd.f32 %v359, %v501
        %v504 = vadd.f32 %v361, %v497
        %v505 = vadd.f32 %v361, %v501
        %v506 = vadd.f32 %v363, %v497
        %v507 = vadd.f32 %v363, %v501
        %v508 = vadd.f32 %v365, %v497
        %v509 = vadd.f32 %v365, %v501
        %v510 = vadd.f32 %v367, %v497
        %v511 = vadd.f32 %v367, %v501
        %v512 = vadd.f32 %v369, %v497
        %v513 = vadd.f32 %v369, %v501
        %v514 = vadd.f32 %v371, %v497
        %v515 = vadd.f32 %v371, %v501
        %v516 = vadd.f32 %v373, %v497
        %v517 = vadd.f32 %v373, %v501
        %v518 = vadd.f32 %v375, %v497
        %v519 = vadd.f32 %v375, %v501
        %v520 = vadd.f32 %v377, %v497
        %v521 = vadd.f32 %v377, %v501
        %v522 = vadd.f32 %v379, %v497
        %v523 = vadd.f32 %v379, %v501
        %v524 = vadd.f32 %v381, %v497
        %v525 = vadd.f32 %v381, %v501
        %v526 = vadd.f32 %v383, %v497
        %v527 = vadd.f32 %v383, %v501
        %v528 = vadd.f32 %v385, %v497
        %v529 = vadd.f32 %v385, %v501
        %v530 = vadd.f32 %v387, %v497
        %v531 = vadd.f32 %v387, %v501
        %v532 = vadd.f32 %v389, %v497
        %v533 = vadd.f32 %v389, %v501
        %vm534 = vcmp.gt.f32.partialorder %v502, 0.0
        %vm535 = vcmp.gt.f32.partialorder %v503, 0.0
        %vm536 = vcmp.gt.f32.partialorder %v504, 0.0
        %vm537 = vcmp.gt.f32.partialorder %v505, 0.0
        %vm538 = vcmp.gt.f32.partialorder %v506, 0.0
        %vm539 = vcmp.gt.f32.partialorder %v507, 0.0
        %vm540 = vcmp.gt.f32.partialorder %v508, 0.0
        %vm541 = vcmp.gt.f32.partialorder %v509, 0.0
        %vm542 = vcmp.gt.f32.partialorder %v510, 0.0
        %vm543 = vcmp.gt.f32.partialorder %v511, 0.0
        %vm544 = vcmp.gt.f32.partialorder %v512, 0.0
        %vm545 = vcmp.gt.f32.partialorder %v513, 0.0
        %vm546 = vcmp.gt.f32.partialorder %v514, 0.0
        %vm547 = vcmp.gt.f32.partialorder %v515, 0.0
        %vm548 = vcmp.gt.f32.partialorder %v516, 0.0
        %vm549 = vcmp.gt.f32.partialorder %v517, 0.0
        %vm550 = vcmp.gt.f32.partialorder %v518, 0.0
        %vm551 = vcmp.gt.f32.partialorder %v519, 0.0
        %vm552 = vcmp.gt.f32.partialorder %v520, 0.0
        %vm553 = vcmp.gt.f32.partialorder %v521, 0.0
        %vm554 = vcmp.gt.f32.partialorder %v522, 0.0
        %vm555 = vcmp.gt.f32.partialorder %v523, 0.0
        %vm556 = vcmp.gt.f32.partialorder %v524, 0.0
        %vm557 = vcmp.gt.f32.partialorder %v525, 0.0
        %vm558 = vcmp.gt.f32.partialorder %v526, 0.0
        %vm559 = vcmp.gt.f32.partialorder %v527, 0.0
        %vm560 = vcmp.gt.f32.partialorder %v528, 0.0
        %vm561 = vcmp.gt.f32.partialorder %v529, 0.0
        %vm562 = vcmp.gt.f32.partialorder %v530, 0.0
        %vm563 = vcmp.gt.f32.partialorder %v531, 0.0
        %vm564 = vcmp.gt.f32.partialorder %v532, 0.0
        %vm565 = vcmp.gt.f32.partialorder %v533, 0.0
        %v566 = vmul.f32 %v502, 0.01
        %v567 = vmul.f32 %v503, 0.01
        %v568 = vmul.f32 %v504, 0.01
        %v569 = vmul.f32 %v505, 0.01
        %v570 = vmul.f32 %v506, 0.01
        %v571 = vmul.f32 %v507, 0.01
        %v572 = vmul.f32 %v508, 0.01
        %v573 = vmul.f32 %v509, 0.01
        %v574 = vmul.f32 %v510, 0.01
        %v575 = vmul.f32 %v511, 0.01
        %v576 = vmul.f32 %v512, 0.01
        %v577 = vmul.f32 %v513, 0.01
        %v578 = vmul.f32 %v514, 0.01
        %v579 = vmul.f32 %v515, 0.01
        %v580 = vmul.f32 %v516, 0.01
        %v581 = vmul.f32 %v517, 0.01
        %v582 = vmul.f32 %v518, 0.01
        %v583 = vmul.f32 %v519, 0.01
        %v584 = vmul.f32 %v520, 0.01
        %v585 = vmul.f32 %v521, 0.01
        %v586 = vmul.f32 %v522, 0.01
        %v587 = vmul.f32 %v523, 0.01
        %v588 = vmul.f32 %v524, 0.01
        %v589 = vmul.f32 %v525, 0.01
        %v590 = vmul.f32 %v526, 0.01
        %v591 = vmul.f32 %v527, 0.01
        %v592 = vmul.f32 %v528, 0.01
        %v593 = vmul.f32 %v529, 0.01
        %v594 = vmul.f32 %v530, 0.01
        %v595 = vmul.f32 %v531, 0.01
        %v596 = vmul.f32 %v532, 0.01
        %v597 = vmul.f32 %v533, 0.01
        %v598 = vsel %vm534, %v502, %v566
        %v599 = vsel %vm535, %v503, %v567
        %v600 = vsel %vm536, %v504, %v568
        %v601 = vsel %vm537, %v505, %v569
        %v602 = vsel %vm538, %v506, %v570
        %v603 = vsel %vm539, %v507, %v571
        %v604 = vsel %vm540, %v508, %v572
        %v605 = vsel %vm541, %v509, %v573
        %v606 = vsel %vm542, %v510, %v574
        %v607 = vsel %vm543, %v511, %v575
        %v608 = vsel %vm544, %v512, %v576
        %v609 = vsel %vm545, %v513, %v577
        %v610 = vsel %vm546, %v514, %v578
        %v611 = vsel %vm547, %v515, %v579
        %v612 = vsel %vm548, %v516, %v580
        %v613 = vsel %vm549, %v517, %v581
        %v614 = vsel %vm550, %v518, %v582
        %v615 = vsel %vm551, %v519, %v583
        %v616 = vsel %vm552, %v520, %v584
        %v617 = vsel %vm553, %v521, %v585
        %v618 = vsel %vm554, %v522, %v586
        %v619 = vsel %vm555, %v523, %v587
        %v620 = vsel %vm556, %v524, %v588
        %v621 = vsel %vm557, %v525, %v589
        %v622 = vsel %vm558, %v526, %v590
        %v623 = vsel %vm559, %v527, %v591
        %v624 = vsel %vm560, %v528, %v592
        %v625 = vsel %vm561, %v529, %v593
        %v626 = vsel %vm562, %v530, %v594
        %v627 = vsel %vm563, %v531, %v595
        %v628 = vsel %vm564, %v532, %v596
        %v629 = vsel %vm565, %v533, %v597
        %v630 = vld [vmem:[%s286] sm:$0xff]
        %v631 = vld [vmem:[%s286 + $0x8] sm:$0xff]
        %v632 = vld [vmem:[%s286 + $0x10] sm:$0xff]
        %v633 = vld [vmem:[%s286 + $0x18] sm:$0xff]
        %v634 = vld [vmem:[%s286 + $0x20] sm:$0xff]
        %v635 = vld [vmem:[%s286 + $0x28] sm:$0xff]
        %v636 = vld [vmem:[%s286 + $0x30] sm:$0xff]
        %v637 = vld [vmem:[%s286 + $0x38] sm:$0xff]
        %v638 = vunpack.c.0.s8 %v630
        %v639 = vunpack.c.0.s8 %v631
        %v640 = vunpack.c.1.s8 %v630
        %v641 = vunpack.c.1.s8 %v631
        %v642 = vunpack.c.2.s8 %v630
        %v643 = vunpack.c.2.s8 %v631
        %v644 = vunpack.c.3.s8 %v630
        %v645 = vunpack.c.3.s8 %v631
        %v646 = vunpack.c.0.s8 %v632
        %v647 = vunpack.c.0.s8 %v633
        %v648 = vunpack.c.1.s8 %v632
        %v649 = vunpack.c.1.s8 %v633
        %v650 = vunpack.c.2.s8 %v632
        %v651 = vunpack.c.2.s8 %v633
        %v652 = vunpack.c.3.s8 %v632
        %v653 = vunpack.c.3.s8 %v633
        %v654 = vunpack.c.0.s8 %v634
        %v655 = vunpack.c.0.s8 %v635
        %v656 = vunpack.c.1.s8 %v634
        %v657 = vunpack.c.1.s8 %v635
        %v658 = vunpack.c.2.s8 %v634
        %v659 = vunpack.c.2.s8 %v635
        %v660 = vunpack.c.3.s8 %v634
        %v661 = vunpack.c.3.s8 %v635
        %v662 = vunpack.c.0.s8 %v636
        %v663 = vunpack.c.0.s8 %v637
        %v664 = vunpack.c.1.s8 %v636
        %v665 = vunpack.c.1.s8 %v637
        %v666 = vunpack.c.2.s8 %v636
        %v667 = vunpack.c.2.s8 %v637
        %v668 = vunpack.c.3.s8 %v636
        %v669 = vunpack.c.3.s8 %v637
        %v670 = vcvt.s32.f32 %v638
        %v671 = vcvt.s32.f32 %v639
        %v672 = vcvt.s32.f32 %v640
        %v673 = vcvt.s32.f32 %v641
        %v674 = vcvt.s32.f32 %v642
        %v675 = vcvt.s32.f32 %v643
        %v676 = vcvt.s32.f32 %v644
        %v677 = vcvt.s32.f32 %v645
        %v678 = vcvt.s32.f32 %v646
        %v679 = vcvt.s32.f32 %v647
        %v680 = vcvt.s32.f32 %v648
        %v681 = vcvt.s32.f32 %v649
        %v682 = vcvt.s32.f32 %v650
        %v683 = vcvt.s32.f32 %v651
        %v684 = vcvt.s32.f32 %v652
        %v685 = vcvt.s32.f32 %v653
        %v686 = vcvt.s32.f32 %v654
        %v687 = vcvt.s32.f32 %v655
        %v688 = vcvt.s32.f32 %v656
        %v689 = vcvt.s32.f32 %v657
        %v690 = vcvt.s32.f32 %v658
        %v691 = vcvt.s32.f32 %v659
        %v692 = vcvt.s32.f32 %v660
        %v693 = vcvt.s32.f32 %v661
        %v694 = vcvt.s32.f32 %v662
        %v695 = vcvt.s32.f32 %v663
        %v696 = vcvt.s32.f32 %v664
        %v697 = vcvt.s32.f32 %v665
        %v698 = vcvt.s32.f32 %v666
        %v699 = vcvt.s32.f32 %v667
        %v700 = vcvt.s32.f32 %v668
        %v701 = vcvt.s32.f32 %v669
        %vm702 = vcmp.gt.f32.partialorder %v670, 0.0
        %vm703 = vcmp.gt.f32.partialorder %v671, 0.0
        %vm704 = vcmp.gt.f32.partialorder %v672, 0.0
        %vm705 = vcmp.gt.f32.partialorder %v673, 0.0
        %vm706 = vcmp.gt.f32.partialorder %v674, 0.0
        %vm707 = vcmp.gt.f32.partialorder %v675, 0.0
        %vm708 = vcmp.gt.f32.partialorder %v676, 0.0
        %vm709 = vcmp.gt.f32.partialorder %v677, 0.0
        %vm710 = vcmp.gt.f32.partialorder %v678, 0.0
        %vm711 = vcmp.gt.f32.partialorder %v679, 0.0
        %vm712 = vcmp.gt.f32.partialorder %v680, 0.0
        %vm713 = vcmp.gt.f32.partialorder %v681, 0.0
        %vm714 = vcmp.gt.f32.partialorder %v682, 0.0
        %vm715 = vcmp.gt.f32.partialorder %v683, 0.0
        %vm716 = vcmp.gt.f32.partialorder %v684, 0.0
        %vm717 = vcmp.gt.f32.partialorder %v685, 0.0
        %vm718 = vcmp.gt.f32.partialorder %v686, 0.0
        %vm719 = vcmp.gt.f32.partialorder %v687, 0.0
        %vm720 = vcmp.gt.f32.partialorder %v688, 0.0
        %vm721 = vcmp.gt.f32.partialorder %v689, 0.0
        %vm722 = vcmp.gt.f32.partialorder %v690, 0.0
        %vm723 = vcmp.gt.f32.partialorder %v691, 0.0
        %vm724 = vcmp.gt.f32.partialorder %v692, 0.0
        %vm725 = vcmp.gt.f32.partialorder %v693, 0.0
        %vm726 = vcmp.gt.f32.partialorder %v694, 0.0
        %vm727 = vcmp.gt.f32.partialorder %v695, 0.0
        %vm728 = vcmp.gt.f32.partialorder %v696, 0.0
        %vm729 = vcmp.gt.f32.partialorder %v697, 0.0
        %vm730 = vcmp.gt.f32.partialorder %v698, 0.0
        %vm731 = vcmp.gt.f32.partialorder %v699, 0.0
        %vm732 = vcmp.gt.f32.partialorder %v700, 0.0
        %vm733 = vcmp.gt.f32.partialorder %v701, 0.0
        %v734 = vsel %vm702, %v598, -1e+30
        %v735 = vsel %vm703, %v599, -1e+30
        %v736 = vsel %vm704, %v600, -1e+30
        %v737 = vsel %vm705, %v601, -1e+30
        %v738 = vsel %vm706, %v602, -1e+30
        %v739 = vsel %vm707, %v603, -1e+30
        %v740 = vsel %vm708, %v604, -1e+30
        %v741 = vsel %vm709, %v605, -1e+30
        %v742 = vsel %vm710, %v606, -1e+30
        %v743 = vsel %vm711, %v607, -1e+30
        %v744 = vsel %vm712, %v608, -1e+30
        %v745 = vsel %vm713, %v609, -1e+30
        %v746 = vsel %vm714, %v610, -1e+30
        %v747 = vsel %vm715, %v611, -1e+30
        %v748 = vsel %vm716, %v612, -1e+30
        %v749 = vsel %vm717, %v613, -1e+30
        %v750 = vsel %vm718, %v614, -1e+30
        %v751 = vsel %vm719, %v615, -1e+30
        %v752 = vsel %vm720, %v616, -1e+30
        %v753 = vsel %vm721, %v617, -1e+30
        %v754 = vsel %vm722, %v618, -1e+30
        %v755 = vsel %vm723, %v619, -1e+30
        %v756 = vsel %vm724, %v620, -1e+30
        %v757 = vsel %vm725, %v621, -1e+30
        %v758 = vsel %vm726, %v622, -1e+30
        %v759 = vsel %vm727, %v623, -1e+30
        %v760 = vsel %vm728, %v624, -1e+30
        %v761 = vsel %vm729, %v625, -1e+30
        %v762 = vsel %vm730, %v626, -1e+30
        %v763 = vsel %vm731, %v627, -1e+30
        %v764 = vsel %vm732, %v628, -1e+30
        %v765 = vsel %vm733, %v629, -1e+30
        %v766 = vmax.f32 %v734, %v735
        %767 = vmax.xlane.f32.xlu0 %v766
        %v768 = vpop.xlane.xlu0 %767
        %v769 = vmax.f32 %v736, %v737
        %770 = vmax.xlane.f32.xlu0 %v769
        %v771 = vpop.xlane.xlu0 %770
        %v772 = vmax.f32 %v738, %v739
        %773 = vmax.xlane.f32.xlu0 %v772
        %v774 = vpop.xlane.xlu0 %773
        %v775 = vmax.f32 %v740, %v741
        %776 = vmax.xlane.f32.xlu0 %v775
        %v777 = vpop.xlane.xlu0 %776
        %v778 = vmax.f32 %v742, %v743
        %779 = vmax.xlane.f32.xlu0 %v778
        %v780 = vpop.xlane.xlu0 %779
        %v781 = vmax.f32 %v744, %v745
        %782 = vmax.xlane.f32.xlu0 %v781
        %v783 = vpop.xlane.xlu0 %782
        %v784 = vmax.f32 %v746, %v747
        %785 = vmax.xlane.f32.xlu0 %v784
        %v786 = vpop.xlane.xlu0 %785
        %v787 = vmax.f32 %v748, %v749
        %788 = vmax.xlane.f32.xlu0 %v787
        %v789 = vpop.xlane.xlu0 %788
        %v790 = vmax.f32 %v750, %v751
        %791 = vmax.xlane.f32.xlu0 %v790
        %v792 = vpop.xlane.xlu0 %791
        %v793 = vmax.f32 %v752, %v753
        %794 = vmax.xlane.f32.xlu0 %v793
        %v795 = vpop.xlane.xlu0 %794
        %v796 = vmax.f32 %v754, %v755
        %797 = vmax.xlane.f32.xlu0 %v796
        %v798 = vpop.xlane.xlu0 %797
        %v799 = vmax.f32 %v756, %v757
        %800 = vmax.xlane.f32.xlu0 %v799
        %v801 = vpop.xlane.xlu0 %800
        %v802 = vmax.f32 %v758, %v759
        %803 = vmax.xlane.f32.xlu0 %v802
        %v804 = vpop.xlane.xlu0 %803
        %v805 = vmax.f32 %v760, %v761
        %806 = vmax.xlane.f32.xlu0 %v805
        %v807 = vpop.xlane.xlu0 %806
        %v808 = vmax.f32 %v762, %v763
        %809 = vmax.xlane.f32.xlu0 %v808
        %v810 = vpop.xlane.xlu0 %809
        %v811 = vmax.f32 %v764, %v765
        %812 = vmax.xlane.f32.xlu0 %v811
        %v813 = vpop.xlane.xlu0 %812
        %v814 = vsub.f32 %v734, %v768
        %v815 = vsub.f32 %v735, %v768
        %v816 = vsub.f32 %v736, %v771
        %v817 = vsub.f32 %v737, %v771
        %v818 = vsub.f32 %v738, %v774
        %v819 = vsub.f32 %v739, %v774
        %v820 = vsub.f32 %v740, %v777
        %v821 = vsub.f32 %v741, %v777
        %v822 = vsub.f32 %v742, %v780
        %v823 = vsub.f32 %v743, %v780
        %v824 = vsub.f32 %v744, %v783
        %v825 = vsub.f32 %v745, %v783
        %v826 = vsub.f32 %v746, %v786
        %v827 = vsub.f32 %v747, %v786
        %v828 = vsub.f32 %v748, %v789
        %v829 = vsub.f32 %v749, %v789
        %v830 = vsub.f32 %v750, %v792
        %v831 = vsub.f32 %v751, %v792
        %v832 = vsub.f32 %v752, %v795
        %v833 = vsub.f32 %v753, %v795
        %v834 = vsub.f32 %v754, %v798
        %v835 = vsub.f32 %v755, %v798
        %v836 = vsub.f32 %v756, %v801
        %v837 = vsub.f32 %v757, %v801
        %v838 = vsub.f32 %v758, %v804
        %v839 = vsub.f32 %v759, %v804
        %v840 = vsub.f32 %v760, %v807
        %v841 = vsub.f32 %v761, %v807
        %v842 = vsub.f32 %v762, %v810
        %v843 = vsub.f32 %v763, %v810
        %v844 = vsub.f32 %v764, %v813
        %v845 = vsub.f32 %v765, %v813
        %v846 = vmul.f32 %v814, 1.442695
        %v847 = vpow.pop %v846
        %v848 = vmul.f32 %v815, 1.442695
        %v849 = vpow.pop %v848
        %v850 = vmul.f32 %v816, 1.442695
        %v851 = vpow.pop %v850
        %v852 = vmul.f32 %v817, 1.442695
        %v853 = vpow.pop %v852
        %v854 = vmul.f32 %v818, 1.442695
        %v855 = vpow.pop %v854
        %v856 = vmul.f32 %v819, 1.442695
        %v857 = vpow.pop %v856
        %v858 = vmul.f32 %v820, 1.442695
        %v859 = vpow.pop %v858
        %v860 = vmul.f32 %v821, 1.442695
        %v861 = vpow.pop %v860
        %v862 = vmul.f32 %v822, 1.442695
        %v863 = vpow.pop %v862
        %v864 = vmul.f32 %v823, 1.442695
        %v865 = vpow.pop %v864
        %v866 = vmul.f32 %v824, 1.442695
        %v867 = vpow.pop %v866
        %v868 = vmul.f32 %v825, 1.442695
        %v869 = vpow.pop %v868
        %v870 = vmul.f32 %v826, 1.442695
        %v871 = vpow.pop %v870
        %v872 = vmul.f32 %v827, 1.442695
        %v873 = vpow.pop %v872
        %v874 = vmul.f32 %v828, 1.442695
        %v875 = vpow.pop %v874
        %v876 = vmul.f32 %v829, 1.442695
        %v877 = vpow.pop %v876
        %v878 = vmul.f32 %v830, 1.442695
        %v879 = vpow.pop %v878
        %v880 = vmul.f32 %v831, 1.442695
        %v881 = vpow.pop %v880
        %v882 = vmul.f32 %v832, 1.442695
        %v883 = vpow.pop %v882
        %v884 = vmul.f32 %v833, 1.442695
        %v885 = vpow.pop %v884
        %v886 = vmul.f32 %v834, 1.442695
        %v887 = vpow.pop %v886
        %v888 = vmul.f32 %v835, 1.442695
        %v889 = vpow.pop %v888
        %v890 = vmul.f32 %v836, 1.442695
        %v891 = vpow.pop %v890
        %v892 = vmul.f32 %v837, 1.442695
        %v893 = vpow.pop %v892
        %v894 = vmul.f32 %v838, 1.442695
        %v895 = vpow.pop %v894
        %v896 = vmul.f32 %v839, 1.442695
        %v897 = vpow.pop %v896
        %v898 = vmul.f32 %v840, 1.442695
        %v899 = vpow.pop %v898
        %v900 = vmul.f32 %v841, 1.442695
        %v901 = vpow.pop %v900
        %v902 = vmul.f32 %v842, 1.442695
        %v903 = vpow.pop %v902
        %v904 = vmul.f32 %v843, 1.442695
        %v905 = vpow.pop %v904
        %v906 = vmul.f32 %v844, 1.442695
        %v907 = vpow.pop %v906
        %v908 = vmul.f32 %v845, 1.442695
        %v909 = vpow.pop %v908
        %v910 = vadd.f32 %v847, %v849
        %911 = vadd.xlane.f32.xlu0 %v910
        %v912 = vpop.xlane.xlu0 %911
        %v913 = vadd.f32 %v851, %v853
        %914 = vadd.xlane.f32.xlu0 %v913
        %v915 = vpop.xlane.xlu0 %914
        %v916 = vadd.f32 %v855, %v857
        %917 = vadd.xlane.f32.xlu0 %v916
        %v918 = vpop.xlane.xlu0 %917
        %v919 = vadd.f32 %v859, %v861
        %920 = vadd.xlane.f32.xlu0 %v919
        %v921 = vpop.xlane.xlu0 %920
        %v922 = vadd.f32 %v863, %v865
        %923 = vadd.xlane.f32.xlu0 %v922
        %v924 = vpop.xlane.xlu0 %923
        %v925 = vadd.f32 %v867, %v869
        %926 = vadd.xlane.f32.xlu0 %v925
        %v927 = vpop.xlane.xlu0 %926
        %v928 = vadd.f32 %v871, %v873
        %929 = vadd.xlane.f32.xlu0 %v928
        %v930 = vpop.xlane.xlu0 %929
        %v931 = vadd.f32 %v875, %v877
        %932 = vadd.xlane.f32.xlu0 %v931
        %v933 = vpop.xlane.xlu0 %932
        %v934 = vadd.f32 %v879, %v881
        %935 = vadd.xlane.f32.xlu0 %v934
        %v936 = vpop.xlane.xlu0 %935
        %v937 = vadd.f32 %v883, %v885
        %938 = vadd.xlane.f32.xlu0 %v937
        %v939 = vpop.xlane.xlu0 %938
        %v940 = vadd.f32 %v887, %v889
        %941 = vadd.xlane.f32.xlu0 %v940
        %v942 = vpop.xlane.xlu0 %941
        %v943 = vadd.f32 %v891, %v893
        %944 = vadd.xlane.f32.xlu0 %v943
        %v945 = vpop.xlane.xlu0 %944
        %v946 = vadd.f32 %v895, %v897
        %947 = vadd.xlane.f32.xlu0 %v946
        %v948 = vpop.xlane.xlu0 %947
        %v949 = vadd.f32 %v899, %v901
        %950 = vadd.xlane.f32.xlu0 %v949
        %v951 = vpop.xlane.xlu0 %950
        %v952 = vadd.f32 %v903, %v905
        %953 = vadd.xlane.f32.xlu0 %v952
        %v954 = vpop.xlane.xlu0 %953
        %v955 = vadd.f32 %v907, %v909
        %956 = vadd.xlane.f32.xlu0 %v955
        %v957 = vpop.xlane.xlu0 %956
        %v958 = vrcp.pop %v912
        %v959 = vrcp.pop %v915
        %v960 = vrcp.pop %v918
        %v961 = vrcp.pop %v921
        %v962 = vrcp.pop %v924
        %v963 = vrcp.pop %v927
        %v964 = vrcp.pop %v930
        %v965 = vrcp.pop %v933
        %v966 = vrcp.pop %v936
        %v967 = vrcp.pop %v939
        %v968 = vrcp.pop %v942
        %v969 = vrcp.pop %v945
        %v970 = vrcp.pop %v948
        %v971 = vrcp.pop %v951
        %v972 = vrcp.pop %v954
        %v973 = vrcp.pop %v957
        %v974 = vmul.f32 %v847, %v958
        %v975 = vmul.f32 %v849, %v958
        %v976 = vmul.f32 %v851, %v959
        %v977 = vmul.f32 %v853, %v959
        %v978 = vmul.f32 %v855, %v960
        %v979 = vmul.f32 %v857, %v960
        %v980 = vmul.f32 %v859, %v961
        %v981 = vmul.f32 %v861, %v961
        %v982 = vmul.f32 %v863, %v962
        %v983 = vmul.f32 %v865, %v962
        %v984 = vmul.f32 %v867, %v963
        %v985 = vmul.f32 %v869, %v963
        %v986 = vmul.f32 %v871, %v964
        %v987 = vmul.f32 %v873, %v964
        %v988 = vmul.f32 %v875, %v965
        %v989 = vmul.f32 %v877, %v965
        %v990 = vmul.f32 %v879, %v966
        %v991 = vmul.f32 %v881, %v966
        %v992 = vmul.f32 %v883, %v967
        %v993 = vmul.f32 %v885, %v967
        %v994 = vmul.f32 %v887, %v968
        %v995 = vmul.f32 %v889, %v968
        %v996 = vmul.f32 %v891, %v969
        %v997 = vmul.f32 %v893, %v969
        %v998 = vmul.f32 %v895, %v970
        %v999 = vmul.f32 %v897, %v970
        %v1000 = vmul.f32 %v899, %v971
        %v1001 = vmul.f32 %v901, %v971
        %v1002 = vmul.f32 %v903, %v972
        %v1003 = vmul.f32 %v905, %v972
        %v1004 = vmul.f32 %v907, %v973
        %v1005 = vmul.f32 %v909, %v973
        %v1006 = vld [vmem:[#allocation2] sm:$0xff]
        %v1007 = vld [vmem:[#allocation2 + $0x8] sm:$0xff]
        %v1008 = vld [vmem:[#allocation2 + $0x10] sm:$0xff]
        %v1009 = vld [vmem:[#allocation2 + $0x18] sm:$0xff]
        %v1010 = vld [vmem:[#allocation2 + $0x20] sm:$0xff]
        %v1011 = vld [vmem:[#allocation2 + $0x28] sm:$0xff]
        %v1012 = vld [vmem:[#allocation2 + $0x30] sm:$0xff]
        %v1013 = vld [vmem:[#allocation2 + $0x38] sm:$0xff]
        %v1014 = vld [vmem:[#allocation2 + $0x40] sm:$0xff]
        %v1015 = vld [vmem:[#allocation2 + $0x48] sm:$0xff]
        %v1016 = vld [vmem:[#allocation2 + $0x50] sm:$0xff]
        %v1017 = vld [vmem:[#allocation2 + $0x58] sm:$0xff]
        %v1018 = vld [vmem:[#allocation2 + $0x60] sm:$0xff]
        %v1019 = vld [vmem:[#allocation2 + $0x68] sm:$0xff]
        %v1020 = vld [vmem:[#allocation2 + $0x70] sm:$0xff]
        %v1021 = vld [vmem:[#allocation2 + $0x78] sm:$0xff]
        %v1022 = vld [vmem:[#allocation2 + $0x80] sm:$0xff]
        %v1023 = vld [vmem:[#allocation2 + $0x88] sm:$0xff]
        %v1024 = vld [vmem:[#allocation2 + $0x90] sm:$0xff]
        %v1025 = vld [vmem:[#allocation2 + $0x98] sm:$0xff]
        %v1026 = vld [vmem:[#allocation2 + $0xa0] sm:$0xff]
        %v1027 = vld [vmem:[#allocation2 + $0xa8] sm:$0xff]
        %v1028 = vld [vmem:[#allocation2 + $0xb0] sm:$0xff]
        %v1029 = vld [vmem:[#allocation2 + $0xb8] sm:$0xff]
        %v1030 = vld [vmem:[#allocation2 + $0xc0] sm:$0xff]
        %v1031 = vld [vmem:[#allocation2 + $0xc8] sm:$0xff]
        %v1032 = vld [vmem:[#allocation2 + $0xd0] sm:$0xff]
        %v1033 = vld [vmem:[#allocation2 + $0xd8] sm:$0xff]
        %v1034 = vld [vmem:[#allocation2 + $0xe0] sm:$0xff]
        %v1035 = vld [vmem:[#allocation2 + $0xe8] sm:$0xff]
        %v1036 = vld [vmem:[#allocation2 + $0xf0] sm:$0xff]
        %v1037 = vld [vmem:[#allocation2 + $0xf8] sm:$0xff]
        %1038 = vmatprep.subr.mxu0 0.0
        %1039 = vmatpush1.msra.mxu0 %v1021
        %1040 = vmatprep.subr.mxu0 0.0
        %1041 = vmatpush1.msra.mxu0 %v1020
        %1042 = vmatprep.subr.mxu0 0.0
        %1043 = vmatpush1.msra.mxu0 %v1019
        %1044 = vmatprep.subr.mxu0 0.0
        %1045 = vmatpush1.msra.mxu0 %v1018
        %1046 = vmatprep.subr.mxu0 0.0
        %1047 = vmatpush1.msra.mxu0 %v1017
        %1048 = vmatprep.subr.mxu0 0.0
        %1049 = vmatpush1.msra.mxu0 %v1016
        %1050 = vmatprep.subr.mxu0 0.0
        %1051 = vmatpush1.msra.mxu0 %v1015
        %1052 = vmatprep.subr.mxu0 0.0
        %1053 = vmatpush1.msra.mxu0 %v1014
        %1054 = vmatprep.subr.mxu0 0.0
        %1055 = vmatpush1.msra.mxu0 %v1013
        %1056 = vmatprep.subr.mxu0 0.0
        %1057 = vmatpush1.msra.mxu0 %v1012
        %1058 = vmatprep.subr.mxu0 0.0
        %1059 = vmatpush1.msra.mxu0 %v1011
        %1060 = vmatprep.subr.mxu0 0.0
        %1061 = vmatpush1.msra.mxu0 %v1010
        %1062 = vmatprep.subr.mxu0 0.0
        %1063 = vmatpush1.msra.mxu0 %v1009
        %1064 = vmatprep.subr.mxu0 0.0
        %1065 = vmatpush1.msra.mxu0 %v1008
        %1066 = vmatprep.subr.mxu0 0.0
        %1067 = vmatpush1.msra.mxu0 %v1007
        %1068 = vmatprep.subr.mxu0 0.0
        %1069 = vmatpush1.msra.mxu0 %v1006
        %1070 = vmatprep.subr.mxu0 0.0
        %1071 = vmatpush2.msra.mxu0 %v1037
        %1072 = vmatprep.subr.mxu0 0.0
        %1073 = vmatpush2.msra.mxu0 %v1036
        %1074 = vmatprep.subr.mxu0 0.0
        %1075 = vmatpush2.msra.mxu0 %v1035
        %1076 = vmatprep.subr.mxu0 0.0
        %1077 = vmatpush2.msra.mxu0 %v1034
        %1078 = vmatprep.subr.mxu0 0.0
        %1079 = vmatpush2.msra.mxu0 %v1033
        %1080 = vmatprep.subr.mxu0 0.0
        %1081 = vmatpush2.msra.mxu0 %v1032
        %1082 = vmatprep.subr.mxu0 0.0
        %1083 = vmatpush2.msra.mxu0 %v1031
        %1084 = vmatprep.subr.mxu0 0.0
        %1085 = vmatpush2.msra.mxu0 %v1030
        %1086 = vmatprep.subr.mxu0 0.0
        %1087 = vmatpush2.msra.mxu0 %v1029
        %1088 = vmatprep.subr.mxu0 0.0
        %1089 = vmatpush2.msra.mxu0 %v1028
        %1090 = vmatprep.subr.mxu0 0.0
        %1091 = vmatpush2.msra.mxu0 %v1027
        %1092 = vmatprep.subr.mxu0 0.0
        %1093 = vmatpush2.msra.mxu0 %v1026
        %1094 = vmatprep.subr.mxu0 0.0
        %1095 = vmatpush2.msra.mxu0 %v1025
        %1096 = vmatprep.subr.mxu0 0.0
        %1097 = vmatpush2.msra.mxu0 %v1024
        %1098 = vmatprep.subr.mxu0 0.0
        %1099 = vmatpush2.msra.mxu0 %v1023
        %1100 = vmatprep.subr.mxu0 0.0
        %1101 = vmatpush2.msra.mxu0 %v1022
        %1102 = vmatprep.mubr.f32.mxu0 %v975
        %1103 = vmatmul.mubr.f32.gmra.mxu0 %v974
        %v1104 = vpop.f32.mrf.mxu0
        %v1105 = vadd.f32 0.0, %v1104
        %v1106 = vpop.f32.mrf.mxu0
        %1107 = vmatprep.mubr.f32.mxu0 %v977
        %1108 = vmatmul.mubr.f32.gmra.mxu0 %v976
        %v1109 = vpop.f32.mrf.mxu0
        %v1110 = vadd.f32 0.0, %v1109
        %v1111 = vpop.f32.mrf.mxu0
        %1112 = vmatprep.mubr.f32.mxu0 %v979
        %1113 = vmatmul.mubr.f32.gmra.mxu0 %v978
        %v1114 = vpop.f32.mrf.mxu0
        %v1115 = vadd.f32 0.0, %v1114
        %v1116 = vpop.f32.mrf.mxu0
        %1117 = vmatprep.mubr.f32.mxu0 %v981
        %1118 = vmatmul.mubr.f32.gmra.mxu0 %v980
        %v1119 = vpop.f32.mrf.mxu0
        %v1120 = vadd.f32 0.0, %v1119
        %v1121 = vpop.f32.mrf.mxu0
        %1122 = vmatprep.mubr.f32.mxu0 %v983
        %1123 = vmatmul.mubr.f32.gmra.mxu0 %v982
        %v1124 = vpop.f32.mrf.mxu0
        %v1125 = vadd.f32 0.0, %v1124
        %v1126 = vpop.f32.mrf.mxu0
        %1127 = vmatprep.mubr.f32.mxu0 %v985
        %1128 = vmatmul.mubr.f32.gmra.mxu0 %v984
        %v1129 = vpop.f32.mrf.mxu0
        %v1130 = vadd.f32 0.0, %v1129
        %v1131 = vpop.f32.mrf.mxu0
        %1132 = vmatprep.mubr.f32.mxu0 %v987
        %1133 = vmatmul.mubr.f32.gmra.mxu0 %v986
        %v1134 = vpop.f32.mrf.mxu0
        %v1135 = vadd.f32 0.0, %v1134
        %v1136 = vpop.f32.mrf.mxu0
        %1137 = vmatprep.mubr.f32.mxu0 %v989
        %1138 = vmatmul.mubr.f32.gmra.mxu0 %v988
        %v1139 = vpop.f32.mrf.mxu0
        %v1140 = vadd.f32 0.0, %v1139
        %v1141 = vpop.f32.mrf.mxu0
        %1142 = vmatprep.mubr.f32.mxu0 %v991
        %1143 = vmatmul.mubr.f32.gmra.mxu0 %v990
        %v1144 = vpop.f32.mrf.mxu0
        %v1145 = vadd.f32 0.0, %v1144
        %v1146 = vpop.f32.mrf.mxu0
        %1147 = vmatprep.mubr.f32.mxu0 %v993
        %1148 = vmatmul.mubr.f32.gmra.mxu0 %v992
        %v1149 = vpop.f32.mrf.mxu0
        %v1150 = vadd.f32 0.0, %v1149
        %v1151 = vpop.f32.mrf.mxu0
        %1152 = vmatprep.mubr.f32.mxu0 %v995
        %1153 = vmatmul.mubr.f32.gmra.mxu0 %v994
        %v1154 = vpop.f32.mrf.mxu0
        %v1155 = vadd.f32 0.0, %v1154
        %v1156 = vpop.f32.mrf.mxu0
        %1157 = vmatprep.mubr.f32.mxu0 %v997
        %1158 = vmatmul.mubr.f32.gmra.mxu0 %v996
        %v1159 = vpop.f32.mrf.mxu0
        %v1160 = vadd.f32 0.0, %v1159
        %v1161 = vpop.f32.mrf.mxu0
        %1162 = vmatprep.mubr.f32.mxu0 %v999
        %1163 = vmatmul.mubr.f32.gmra.mxu0 %v998
        %v1164 = vpop.f32.mrf.mxu0
        %v1165 = vadd.f32 0.0, %v1164
        %v1166 = vpop.f32.mrf.mxu0
        %1167 = vmatprep.mubr.f32.mxu0 %v1001
        %1168 = vmatmul.mubr.f32.gmra.mxu0 %v1000
        %v1169 = vpop.f32.mrf.mxu0
        %v1170 = vadd.f32 0.0, %v1169
        %v1171 = vpop.f32.mrf.mxu0
        %1172 = vmatprep.mubr.f32.mxu0 %v1003
        %1173 = vmatmul.mubr.f32.gmra.mxu0 %v1002
        %v1174 = vpop.f32.mrf.mxu0
        %v1175 = vadd.f32 0.0, %v1174
        %v1176 = vpop.f32.mrf.mxu0
        %1177 = vmatprep.mubr.f32.mxu0 %v1005
        %1178 = vmatmul.mubr.f32.gmra.mxu0 %v1004
        %v1179 = vpop.f32.mrf.mxu0
        %v1180 = vadd.f32 0.0, %v1179
        %v1181 = vpop.f32.mrf.mxu0
        %1182 = vdwg.mxu0
        %v1183 = vld [vmem:[#allocation7] sm:$0xff]
        %v1184 = vld [vmem:[#allocation7 + $0x8] sm:$0xff]
        %v1185 = vld [vmem:[#allocation7 + $0x10] sm:$0xff]
        %v1186 = vld [vmem:[#allocation7 + $0x18] sm:$0xff]
        %v1187 = vld [vmem:[#allocation7 + $0x20] sm:$0xff]
        %v1188 = vld [vmem:[#allocation7 + $0x28] sm:$0xff]
        %v1189 = vld [vmem:[#allocation7 + $0x30] sm:$0xff]
        %v1190 = vld [vmem:[#allocation7 + $0x38] sm:$0xff]
        %v1191 = vld [vmem:[#allocation7 + $0x40] sm:$0xff]
        %v1192 = vld [vmem:[#allocation7 + $0x48] sm:$0xff]
        %v1193 = vld [vmem:[#allocation7 + $0x50] sm:$0xff]
        %v1194 = vld [vmem:[#allocation7 + $0x58] sm:$0xff]
        %v1195 = vld [vmem:[#allocation7 + $0x60] sm:$0xff]
        %v1196 = vld [vmem:[#allocation7 + $0x68] sm:$0xff]
        %v1197 = vld [vmem:[#allocation7 + $0x70] sm:$0xff]
        %v1198 = vld [vmem:[#allocation7 + $0x78] sm:$0xff]
        %1199 = vmatprep.subr.mxu0 0.0
        %1200 = vmatpush1.msra.mxu0 %v1198
        %1201 = vmatprep.subr.mxu0 0.0
        %1202 = vmatpush1.msra.mxu0 %v1197
        %1203 = vmatprep.subr.mxu0 0.0
        %1204 = vmatpush1.msra.mxu0 %v1196
        %1205 = vmatprep.subr.mxu0 0.0
        %1206 = vmatpush1.msra.mxu0 %v1195
        %1207 = vmatprep.subr.mxu0 0.0
        %1208 = vmatpush1.msra.mxu0 %v1194
        %1209 = vmatprep.subr.mxu0 0.0
        %1210 = vmatpush1.msra.mxu0 %v1193
        %1211 = vmatprep.subr.mxu0 0.0
        %1212 = vmatpush1.msra.mxu0 %v1192
        %1213 = vmatprep.subr.mxu0 0.0
        %1214 = vmatpush1.msra.mxu0 %v1191
        %1215 = vmatprep.subr.mxu0 0.0
        %1216 = vmatpush1.msra.mxu0 %v1190
        %1217 = vmatprep.subr.mxu0 0.0
        %1218 = vmatpush1.msra.mxu0 %v1189
        %1219 = vmatprep.subr.mxu0 0.0
        %1220 = vmatpush1.msra.mxu0 %v1188
        %1221 = vmatprep.subr.mxu0 0.0
        %1222 = vmatpush1.msra.mxu0 %v1187
        %1223 = vmatprep.subr.mxu0 0.0
        %1224 = vmatpush1.msra.mxu0 %v1186
        %1225 = vmatprep.subr.mxu0 0.0
        %1226 = vmatpush1.msra.mxu0 %v1185
        %1227 = vmatprep.subr.mxu0 0.0
        %1228 = vmatpush1.msra.mxu0 %v1184
        %1229 = vmatprep.subr.mxu0 0.0
        %1230 = vmatpush1.msra.mxu0 %v1183
        %1231 = vmatprep.subr.mxu0 0.0
        %1232 = vmatpush2.msra.mxu0 0.0
        %1233 = vmatprep.subr.mxu0 0.0
        %1234 = vmatpush2.msra.mxu0 0.0
        %1235 = vmatprep.subr.mxu0 0.0
        %1236 = vmatpush2.msra.mxu0 0.0
        %1237 = vmatprep.subr.mxu0 0.0
        %1238 = vmatpush2.msra.mxu0 0.0
        %1239 = vmatprep.subr.mxu0 0.0
        %1240 = vmatpush2.msra.mxu0 0.0
        %1241 = vmatprep.subr.mxu0 0.0
        %1242 = vmatpush2.msra.mxu0 0.0
        %1243 = vmatprep.subr.mxu0 0.0
        %1244 = vmatpush2.msra.mxu0 0.0
        %1245 = vmatprep.subr.mxu0 0.0
        %1246 = vmatpush2.msra.mxu0 0.0
        %1247 = vmatprep.subr.mxu0 0.0
        %1248 = vmatpush2.msra.mxu0 0.0
        %1249 = vmatprep.subr.mxu0 0.0
        %1250 = vmatpush2.msra.mxu0 0.0
        %1251 = vmatprep.subr.mxu0 0.0
        %1252 = vmatpush2.msra.mxu0 0.0
        %1253 = vmatprep.subr.mxu0 0.0
        %1254 = vmatpush2.msra.mxu0 0.0
        %1255 = vmatprep.subr.mxu0 0.0
        %1256 = vmatpush2.msra.mxu0 0.0
        %1257 = vmatprep.subr.mxu0 0.0
        %1258 = vmatpush2.msra.mxu0 0.0
        %1259 = vmatprep.subr.mxu0 0.0
        %1260 = vmatpush2.msra.mxu0 0.0
        %1261 = vmatprep.subr.mxu0 0.0
        %1262 = vmatpush2.msra.mxu0 0.0
        %1263 = vmatprep.mubr.f32.mxu0 0.0
        %1264 = vmatmul.mubr.f32.gmra.mxu0 %v1105
        %v1265 = vpop.f32.mrf.mxu0
        %v1266 = vadd.f32 0.0, %v1265
        %v1267 = vpop.f32.mrf.mxu0
        %1268 = vmatprep.mubr.f32.mxu0 0.0
        %1269 = vmatmul.mubr.f32.gmra.mxu0 %v1110
        %v1270 = vpop.f32.mrf.mxu0
        %v1271 = vadd.f32 0.0, %v1270
        %v1272 = vpop.f32.mrf.mxu0
        %1273 = vmatprep.mubr.f32.mxu0 0.0
        %1274 = vmatmul.mubr.f32.gmra.mxu0 %v1115
        %v1275 = vpop.f32.mrf.mxu0
        %v1276 = vadd.f32 0.0, %v1275
        %v1277 = vpop.f32.mrf.mxu0
        %1278 = vmatprep.mubr.f32.mxu0 0.0
        %1279 = vmatmul.mubr.f32.gmra.mxu0 %v1120
        %v1280 = vpop.f32.mrf.mxu0
        %v1281 = vadd.f32 0.0, %v1280
        %v1282 = vpop.f32.mrf.mxu0
        %1283 = vmatprep.mubr.f32.mxu0 0.0
        %1284 = vmatmul.mubr.f32.gmra.mxu0 %v1125
        %v1285 = vpop.f32.mrf.mxu0
        %v1286 = vadd.f32 0.0, %v1285
        %v1287 = vpop.f32.mrf.mxu0
        %1288 = vmatprep.mubr.f32.mxu0 0.0
        %1289 = vmatmul.mubr.f32.gmra.mxu0 %v1130
        %v1290 = vpop.f32.mrf.mxu0
        %v1291 = vadd.f32 0.0, %v1290
        %v1292 = vpop.f32.mrf.mxu0
        %1293 = vmatprep.mubr.f32.mxu0 0.0
        %1294 = vmatmul.mubr.f32.gmra.mxu0 %v1135
        %v1295 = vpop.f32.mrf.mxu0
        %v1296 = vadd.f32 0.0, %v1295
        %v1297 = vpop.f32.mrf.mxu0
        %1298 = vmatprep.mubr.f32.mxu0 0.0
        %1299 = vmatmul.mubr.f32.gmra.mxu0 %v1140
        %v1300 = vpop.f32.mrf.mxu0
        %v1301 = vadd.f32 0.0, %v1300
        %v1302 = vpop.f32.mrf.mxu0
        %1303 = vmatprep.mubr.f32.mxu0 0.0
        %1304 = vmatmul.mubr.f32.gmra.mxu0 %v1145
        %v1305 = vpop.f32.mrf.mxu0
        %v1306 = vadd.f32 0.0, %v1305
        %v1307 = vpop.f32.mrf.mxu0
        %1308 = vmatprep.mubr.f32.mxu0 0.0
        %1309 = vmatmul.mubr.f32.gmra.mxu0 %v1150
        %v1310 = vpop.f32.mrf.mxu0
        %v1311 = vadd.f32 0.0, %v1310
        %v1312 = vpop.f32.mrf.mxu0
        %1313 = vmatprep.mubr.f32.mxu0 0.0
        %1314 = vmatmul.mubr.f32.gmra.mxu0 %v1155
        %v1315 = vpop.f32.mrf.mxu0
        %v1316 = vadd.f32 0.0, %v1315
        %v1317 = vpop.f32.mrf.mxu0
        %1318 = vmatprep.mubr.f32.mxu0 0.0
        %1319 = vmatmul.mubr.f32.gmra.mxu0 %v1160
        %v1320 = vpop.f32.mrf.mxu0
        %v1321 = vadd.f32 0.0, %v1320
        %v1322 = vpop.f32.mrf.mxu0
        %1323 = vmatprep.mubr.f32.mxu0 0.0
        %1324 = vmatmul.mubr.f32.gmra.mxu0 %v1165
        %v1325 = vpop.f32.mrf.mxu0
        %v1326 = vadd.f32 0.0, %v1325
        %v1327 = vpop.f32.mrf.mxu0
        %1328 = vmatprep.mubr.f32.mxu0 0.0
        %1329 = vmatmul.mubr.f32.gmra.mxu0 %v1170
        %v1330 = vpop.f32.mrf.mxu0
        %v1331 = vadd.f32 0.0, %v1330
        %v1332 = vpop.f32.mrf.mxu0
        %1333 = vmatprep.mubr.f32.mxu0 0.0
        %1334 = vmatmul.mubr.f32.gmra.mxu0 %v1175
        %v1335 = vpop.f32.mrf.mxu0
        %v1336 = vadd.f32 0.0, %v1335
        %v1337 = vpop.f32.mrf.mxu0
        %1338 = vmatprep.mubr.f32.mxu0 0.0
        %1339 = vmatmul.mubr.f32.gmra.mxu0 %v1180
        %v1340 = vpop.f32.mrf.mxu0
        %v1341 = vadd.f32 0.0, %v1340
        %v1342 = vpop.f32.mrf.mxu0
        %1343 = vdwg.mxu0
        %1344 = vst [vmem:[%s314] sm:$0xff] %v1266
        %1345 = vst [vmem:[%s314 + $0x8] sm:$0xff] %v1271
        %1346 = vst [vmem:[%s314 + $0x10] sm:$0xff] %v1276
        %1347 = vst [vmem:[%s314 + $0x18] sm:$0xff] %v1281
        %1348 = vst [vmem:[%s314 + $0x20] sm:$0xff] %v1286
        %1349 = vst [vmem:[%s314 + $0x28] sm:$0xff] %v1291
        %1350 = vst [vmem:[%s314 + $0x30] sm:$0xff] %v1296
        %1351 = vst [vmem:[%s314 + $0x38] sm:$0xff] %v1301
        %1352 = vst [vmem:[%s314 + $0x40] sm:$0xff] %v1306
        %1353 = vst [vmem:[%s314 + $0x48] sm:$0xff] %v1311
        %1354 = vst [vmem:[%s314 + $0x50] sm:$0xff] %v1316
        %1355 = vst [vmem:[%s314 + $0x58] sm:$0xff] %v1321
        %1356 = vst [vmem:[%s314 + $0x60] sm:$0xff] %v1326
        %1357 = vst [vmem:[%s314 + $0x68] sm:$0xff] %v1331
        %1358 = vst [vmem:[%s314 + $0x70] sm:$0xff] %v1336
        %1359 = vst [vmem:[%s314 + $0x78] sm:$0xff] %v1341
        %s1360 = sand.u32 %s164, 1
        %s1361 = scalar_lea.sflag [#allocation4], %s1360
        %s1362 = sand.u32 %s164, 1
        %s1363 = smul.addr %s1362, 128
        %s1364 = scalar_lea.vmem [#allocation10], %s1363
        // Predicated region
        $region61: #{tpu_custom_call.1} parent=43 // pred_check
          %p1365 = pneg %p174
        $region62: #{tpu_custom_call.1} parent=43 // pred_check_branch
          %1367 = sbr.rel (%p1365) target = $region64
        $region63: #{tpu_custom_call.1} parent=43 // pred_region
          %s1368 = smul.u32 16, %s25
          %s1370 = ssub.s32 2048, 2048
          %1371 = vsyncadd %s1361, %s1370
          %s1372 = smul.addr %s1368, 128
          %s1373 = scalar_lea.hbm %s6, %s1372
          %s1374 = sshll.u32 %s1364, 4
          %s1375 = int_to_ptr.vmem [resolvable:$true] %s1374
          %1380 = dma.vmem_to_hbm [thread:$0]  %s1375, 2048, %s1373, %s1361, 128, 128, 8
        $region64: #{tpu_custom_call.1} parent=43 // pred_fallthru
          _
      $region44: #{tpu_custom_call.1} parent=5 // pred_fallthru
        _
      %p1381 = scmp.le.s32.totalorder 2, %s20
      // Predicated region
      $region65: #{tpu_custom_call.1} parent=5 // pred_check
        %p1382 = pneg %p1381
      $region66: #{tpu_custom_call.1} parent=5 // pred_check_branch
        %1384 = sbr.rel (%p1382) target = $region68
      $region67: #{tpu_custom_call.1} parent=5 // pred_region
        %s1385 = ssub.s32 %s20, 2
        // Predicated region
        $region69: #{tpu_custom_call.1} parent=67 // pred_check
          %p1386 = pneg %p180
        $region70: #{tpu_custom_call.1} parent=67 // pred_check_branch
          %1388 = sbr.rel (%p1386) target = $region72
        $region71: #{tpu_custom_call.1} parent=67 // pred_region
          %s1389 = sand.u32 %s165, 1
          %s1390 = scalar_lea.sflag [#allocation4], %s1389
          %s1391 = sand.u32 %s165, 1
          %s1392 = smul.addr %s1391, 128
          %s1393 = scalar_lea.vmem [#allocation10], %s1392
          %1394 = dma.done %s1390, 2048
        $region72: #{tpu_custom_call.1} parent=67 // pred_fallthru
          _
      $region68: #{tpu_custom_call.1} parent=5 // pred_fallthru
        _
    $region6: #{tpu_custom_call.1} parent=1 // loop_footer
      %s24 = sadd.s32 1, %s20
    $region7: #{tpu_custom_call.1} parent=1 // loop_footer_branch
      %19 = sbr.rel target = $region3
    $region8: #{tpu_custom_call.1} parent=1 // loop_exit
      _
    %1395 = vsyncpa [#allocation3], 1
    %s1396 = scalar_lea.sflag [#allocation3], 1
    %1397 = vsyncpa %s1396, 1
    %1398 = vsyncpa [#allocation6], 1
    %1399 = vsyncpa [#allocation9], 1
    %s1400 = scalar_lea.sflag [#allocation9], 1
    %1401 = vsyncpa %s1400, 1
    %1402 = vsyncpa [#allocation4], 1
    %s1403 = scalar_lea.sflag [#allocation4], 1
    %1404 = vsyncpa %s1403, 1

</llo_original>
